<compile_context>
chip_gen: v7x
topology: tpu7x:2x2x1
jax: 0.10.0
libtpu: 0.0.40
codegen_flags: <defaults>
</compile_context>

<pallas_src>
import math
import functools

import jax
import jax.numpy as jnp
from jax import lax
from jax.experimental import pallas as pl
from jax.experimental.pallas import tpu as pltpu


def _round_up(n, m):
    return ((n + m - 1) // m) * m


def _lstm_kernel(x_ref, u_ref, v_ref, b_ref, w_ref, wb_ref,
                 y_ref, h_ref, c_ref,
                 gx_ref, hstore_ref, *,
                 hidden, t_block, seq_len, needs_mask, unroll):
    tb = pl.program_id(1)            # time-block index (serial axis)

    # Recurrent state lives in the h/c output blocks (constant index map along
    # the time axis -> VMEM-resident).  Initialize once per batch tile.
    @pl.when(tb == 0)
    def _():
        h_ref[...] = jnp.zeros_like(h_ref)
        c_ref[...] = jnp.zeros_like(c_ref)

    H = hidden
    b_tile = h_ref.shape[0]
    in_p = x_ref.shape[-1]
    rows = t_block * b_tile

    # ---- Hoisted input projection for the whole time block (big-M matmul) ---
    x_blk = x_ref[...].reshape(rows, in_p)                       # bf16
    bias = jnp.broadcast_to(b_ref[...], (rows, 4 * H))           # f32, hoisted
    gx = jnp.dot(x_blk, u_ref[...],
                 preferred_element_type=jnp.float32) + bias      # (rows, 4H) f32
    gx_ref[...] = gx.reshape(t_block, b_tile, 4 * H)

    v = v_ref[...]                                               # (H, 4H) bf16

    def step(tt, carry):
        h_prev, c_prev = carry                                   # f32 state
        # Only the true serial dependency (h @ V) stays in the loop.
        gates = gx_ref[tt] + jnp.dot(h_prev.astype(jnp.bfloat16), v,
                                     preferred_element_type=jnp.float32)
        i_t = jax.nn.sigmoid(gates[:, 0 * H:1 * H])
        f_t = jax.nn.sigmoid(gates[:, 1 * H:2 * H])
        g_t = jnp.tanh(gates[:, 2 * H:3 * H])
        o_t = jax.nn.sigmoid(gates[:, 3 * H:4 * H])

        c_t = f_t * c_prev + i_t * g_t
        h_t = o_t * jnp.tanh(c_t)

        if needs_mask:  # only when seq was padded up to a multiple of t_block
            valid = (tb * t_block + tt) < seq_len
            h_t = jnp.where(valid, h_t, h_prev)
            c_t = jnp.where(valid, c_t, c_prev)

        hstore_ref[tt] = h_t.astype(jnp.bfloat16)
        return (h_t, c_t)

    h_fin, c_fin = lax.fori_loop(0, t_block, step,
                                 (h_ref[...], c_ref[...]), unroll=unroll)
    h_ref[...] = h_fin
    c_ref[...] = c_fin

    # ---- Hoisted output projection: one big matmul, one lane-dense store ----
    out_p = w_ref.shape[1]
    h_all = hstore_ref[...].reshape(rows, H)                     # bf16
    wbias = jnp.broadcast_to(wb_ref[...], (rows, out_p))         # f32, hoisted
    y = jnp.dot(h_all, w_ref[...],
                preferred_element_type=jnp.float32) + wbias
    y_ref[...] = y.reshape(t_block, b_tile, out_p).astype(y_ref.dtype)


def lstm_forward(x, params, *, t_block=None):
    """x: (bs, seq, input_sz) float32 — same convention as the torch module."""
    bs, seq, input_sz = x.shape
    U, V, b, W_t, wb = params          # U:(in,4H) V:(H,4H) b:(1,4H) W_t:(H,out) wb:(1,out)
    hidden = V.shape[0]
    out_features = W_t.shape[1]

    # Hardware-friendly padded sizes (sublane = 8, lane = 128).
    bs_p = _round_up(bs, 8)
    hid_p = _round_up(hidden, 128)
    out_p = _round_up(out_features, 128)
    in_p = _round_up(input_sz, 128)

    if t_block is None:
        t_block = max(1, min(seq, 32))   # sweep 32/64/128 for long sequences
    seq_p = _round_up(seq, t_block)
    needs_mask = seq_p != seq

    # Batch tiling: give v7x's second TensorCore its own independent
    # recurrence when the batch is big enough; no-op for small batches.
    if bs_p >= 16 and bs_p % 16 == 0:
        b_tile = bs_p // 2
    else:
        b_tile = bs_p
    n_btiles = bs_p // b_tile

    # Zero-padding is exactly neutral: padded hidden lanes have zero weights
    # and biases so their h/c stay identically zero; padded W rows/cols and
    # padded input lanes contribute nothing to real lanes.
    def pad_gate_cols(m):
        lead = m.shape[0]
        m4 = m.reshape(lead, 4, hidden)
        m4 = jnp.pad(m4, ((0, 0), (0, 0), (0, hid_p - hidden)))
        return m4.reshape(lead, 4 * hid_p)

    U_p = pad_gate_cols(jnp.pad(U, ((0, in_p - input_sz), (0, 0)))
                        ).astype(jnp.bfloat16)                              # (in_p, 4Hp)
    V_p = pad_gate_cols(jnp.pad(V, ((0, hid_p - hidden), (0, 0)))
                        ).astype(jnp.bfloat16)                              # (Hp,  4Hp)
    b_p = pad_gate_cols(b)                                                  # (1,   4Hp) f32
    W_p = jnp.pad(W_t, ((0, hid_p - hidden), (0, out_p - out_features))
                  ).astype(jnp.bfloat16)                                    # (Hp, out_p)
    wb_p = jnp.pad(wb, ((0, 0), (0, out_p - out_features)))                 # (1,  out_p) f32

    # Time-major, padded, bf16 activations (f32 accumulation in-kernel).
    x_tm = jnp.transpose(x, (1, 0, 2))                                      # (seq, bs, in)
    x_tm = jnp.pad(x_tm, ((0, seq_p - seq), (0, bs_p - bs), (0, in_p - input_sz)))
    x_tm = x_tm.astype(jnp.bfloat16)

    # Guard vreg pressure: gates are (b_tile, 4*hid_p) f32 live per step.
    unroll = True if hid_p <= 512 else 4

    kernel = functools.partial(_lstm_kernel, hidden=hid_p, t_block=t_block,
                               seq_len=seq, needs_mask=needs_mask, unroll=unroll)

    y_seq, h_t, c_t = pl.pallas_call(
        kernel,
        out_shape=(
            jax.ShapeDtypeStruct((seq_p, bs_p, out_p), jnp.bfloat16),  # y: bf16 writeback
            jax.ShapeDtypeStruct((bs_p, hid_p), jnp.float32),          # final h
            jax.ShapeDtypeStruct((bs_p, hid_p), jnp.float32),          # final c
        ),
        grid_spec=pltpu.PrefetchScalarGridSpec(
            num_scalar_prefetch=0,
            grid=(n_btiles, seq_p // t_block),
            in_specs=[
                pl.BlockSpec((t_block, b_tile, in_p), lambda bi, tb: (tb, bi, 0)),
                # Weights: constant index maps -> DMA'd once, VMEM-resident.
                pl.BlockSpec((in_p, 4 * hid_p), lambda bi, tb: (0, 0)),
                pl.BlockSpec((hid_p, 4 * hid_p), lambda bi, tb: (0, 0)),
                pl.BlockSpec((1, 4 * hid_p), lambda bi, tb: (0, 0)),
                pl.BlockSpec((hid_p, out_p), lambda bi, tb: (0, 0)),
                pl.BlockSpec((1, out_p), lambda bi, tb: (0, 0)),
            ],
            out_specs=[
                pl.BlockSpec((t_block, b_tile, out_p), lambda bi, tb: (tb, bi, 0)),
                # h/c: constant index map over the time axis -> used directly
                # as the VMEM-resident recurrent state (no scratch, no copy).
                pl.BlockSpec((b_tile, hid_p), lambda bi, tb: (bi, 0)),
                pl.BlockSpec((b_tile, hid_p), lambda bi, tb: (bi, 0)),
            ],
            scratch_shapes=[
                pltpu.VMEM((t_block, b_tile, 4 * hid_p), jnp.float32),  # staged x@U + b
                pltpu.VMEM((t_block, b_tile, hid_p), jnp.bfloat16),     # staged h_t
            ],
        ),
        compiler_params=pltpu.CompilerParams(
            dimension_semantics=("parallel", "arbitrary")),
    )(x_tm, U_p, V_p, b_p, W_p, wb_p)

    # Strip padding; widen y back to f32 outside the kernel.
    y = y_seq[:seq, :bs, :out_features].astype(jnp.float32)
    h_t = h_t[:bs, :hidden]
    c_t = c_t[:bs, :hidden]

    # Reproduce torch: cat over t along dim 0 -> (seq*bs, out); transpose(0,1).
    hidden_seq = y.reshape(seq * bs, out_features).T                        # (out, seq*bs)
    return hidden_seq, (h_t, c_t)


def init_params(key, input_sz, hidden_sz, out_features):
    stdv = 1.0 / math.sqrt(hidden_sz)
    ks = jax.random.split(key, 14)
    u = lambda k, shp: jax.random.uniform(k, shp, jnp.float32, -stdv, stdv)
    U_i, U_f, U_c, U_o = (u(ks[j], (input_sz, hidden_sz)) for j in range(4))
    V_i, V_f, V_c, V_o = (u(ks[4 + j], (hidden_sz, hidden_sz)) for j in range(4))
    b_i, b_f, b_c, b_o = (u(ks[8 + j], (hidden_sz,)) for j in range(4))
    W = u(ks[12], (out_features, hidden_sz))   # torch Linear weight (out, in)
    wb = u(ks[13], (out_features,))

    U = jnp.concatenate([U_i, U_f, U_c, U_o], axis=1)           # (in, 4H)
    V = jnp.concatenate([V_i, V_f, V_c, V_o], axis=1)           # (H, 4H)
    b = jnp.concatenate([b_i, b_f, b_c, b_o])[None, :]          # (1, 4H)
    W_t = W.T                                                   # (H, out)
    wb = wb[None, :]                                            # (1, out)
    return (U, V, b, W_t, wb)


def lstm_reference(x, params):
    """Pure-JAX f32 reference mirroring the PyTorch forward exactly."""
    bs, seq, _ = x.shape
    U, V, b, W_t, wb = params
    hidden = V.shape[0]
    h = jnp.zeros((bs, hidden), jnp.float32)
    c = jnp.zeros((bs, hidden), jnp.float32)
    ys = []
    for t in range(seq):
        x_t = x[:, t, :]
        gates = x_t @ U + h @ V + b
        i = jax.nn.sigmoid(gates[:, :hidden])
        f = jax.nn.sigmoid(gates[:, hidden:2 * hidden])
        g = jnp.tanh(gates[:, 2 * hidden:3 * hidden])
        o = jax.nn.sigmoid(gates[:, 3 * hidden:])
        c = f * c + i * g
        h = o * jnp.tanh(c)
        ys.append(h @ W_t + wb)
    hidden_seq = jnp.concatenate(ys, axis=0).T
    return hidden_seq, (h, c)


if __name__ == "__main__":
    # Small shapes consistent with the module's forward.
    bs, seq, input_sz, hidden_sz, out_features = 2, 8, 16, 32, 8

    key = jax.random.PRNGKey(0)
    k_x, k_p = jax.random.split(key)
    x = jax.random.normal(k_x, (bs, seq, input_sz), jnp.float32)
    params = init_params(k_p, input_sz, hidden_sz, out_features)

    fwd = jax.jit(lstm_forward)
    y, (h_t, c_t) = jax.block_until_ready(fwd(x, params))

    y_ref, (h_ref, c_ref) = lstm_reference(x, params)
    assert y.shape == (out_features, seq * bs)
    # Tolerance loosened vs. the f32 reference because matmul operands and the
    # y writeback run in bf16 (f32 accumulation; recurrent h/c kept in f32).
    assert jnp.allclose(y, y_ref, atol=5e-2, rtol=5e-2)
    assert jnp.allclose(h_t, h_ref, atol=5e-2, rtol=5e-2)
    assert jnp.allclose(c_t, c_ref, atol=5e-2, rtol=5e-2)

    print("KERNEL_OK")
</pallas_src>

<mosaic_0001>
module attributes {stable_mosaic.version = 11 : i64} {
  func.func @_lstm_kernel(%arg0: i32, %arg1: i32, %arg2: memref<8x8x128xbf16, #tpu.memory_space<vmem>>, %arg3: memref<128x512xbf16, #tpu.memory_space<vmem>>, %arg4: memref<128x512xbf16, #tpu.memory_space<vmem>>, %arg5: memref<1x512xf32, #tpu.memory_space<vmem>>, %arg6: memref<128x128xbf16, #tpu.memory_space<vmem>>, %arg7: memref<1x128xf32, #tpu.memory_space<vmem>>, %arg8: memref<8x8x128xbf16, #tpu.memory_space<vmem>>, %arg9: memref<8x128xf32, #tpu.memory_space<vmem>>, %arg10: memref<8x128xf32, #tpu.memory_space<vmem>>, %arg11: memref<8x8x512xf32, #tpu.memory_space<vmem>>, %arg12: memref<8x8x128xbf16, #tpu.memory_space<vmem>>) attributes {dimension_semantics = [#tpu.dimension_semantics<parallel>, #tpu.dimension_semantics<arbitrary>], iteration_bounds = array<i64: 1, 1>, scalar_prefetch = 0 : i64, scratch_operands = 2 : i64, tpu.core_type = #tpu.core_type<tc>, window_params = [{transform_indices = @transform_0, window_bounds = array<i64: 8, 8, 128>}, {pipeline_mode = #tpu.pipeline_mode<synchronous>, transform_indices = @transform_1, window_bounds = array<i64: 128, 512>}, {pipeline_mode = #tpu.pipeline_mode<synchronous>, transform_indices = @transform_2, window_bounds = array<i64: 128, 512>}, {pipeline_mode = #tpu.pipeline_mode<synchronous>, transform_indices = @transform_3, window_bounds = array<i64: 1, 512>}, {pipeline_mode = #tpu.pipeline_mode<synchronous>, transform_indices = @transform_4, window_bounds = array<i64: 128, 128>}, {pipeline_mode = #tpu.pipeline_mode<synchronous>, transform_indices = @transform_5, window_bounds = array<i64: 1, 128>}, {transform_indices = @transform_6, window_bounds = array<i64: 8, 8, 128>}, {transform_indices = @transform_7, window_bounds = array<i64: 8, 128>}, {transform_indices = @transform_8, window_bounds = array<i64: 8, 128>}]} {
    %c0_i32 = arith.constant 0 : i32
    %0 = arith.cmpi eq, %arg1, %c0_i32 : i32
    %1 = arith.extui %0 : i1 to i32
    %c0_i32_0 = arith.constant 0 : i32
    %2 = arith.cmpi ne, %1, %c0_i32_0 : i32
    scf.if %2 {
      %cst_96 = arith.constant 0.000000e+00 : f32
      %317 = vector.broadcast %cst_96 : f32 to vector<8x128xf32>
      %c0_97 = arith.constant 0 : index
      %c0_98 = arith.constant 0 : index
      %318 = vector.load %arg9[%c0_97, %c0_98] : memref<8x128xf32, #tpu.memory_space<vmem>>, vector<8x128xf32>
      tpu.vector_store %arg9[%c0_97, %c0_98], %317 {strides = array<i32>} : memref<8x128xf32, #tpu.memory_space<vmem>>, vector<8x128xf32>,
      %cst_99 = arith.constant 0.000000e+00 : f32
      %319 = vector.broadcast %cst_99 : f32 to vector<8x128xf32>
      %c0_100 = arith.constant 0 : index
      %c0_101 = arith.constant 0 : index
      %320 = vector.load %arg10[%c0_100, %c0_101] : memref<8x128xf32, #tpu.memory_space<vmem>>, vector<8x128xf32>
      tpu.vector_store %arg10[%c0_100, %c0_101], %319 {strides = array<i32>} : memref<8x128xf32, #tpu.memory_space<vmem>>, vector<8x128xf32>,
    } else {
    }
    %c0 = arith.constant 0 : index
    %c0_1 = arith.constant 0 : index
    %c0_2 = arith.constant 0 : index
    %3 = vector.load %arg2[%c0, %c0_1, %c0_2] : memref<8x8x128xbf16, #tpu.memory_space<vmem>>, vector<8x8x128xbf16>
    %4 = vector.shape_cast %3 : vector<8x8x128xbf16> to vector<64x128xbf16>
    %c0_3 = arith.constant 0 : index
    %c0_4 = arith.constant 0 : index
    %5 = vector.load %arg5[%c0_3, %c0_4] : memref<1x512xf32, #tpu.memory_space<vmem>>, vector<1x512xf32>
    %6 = vector.shape_cast %5 : vector<1x512xf32> to vector<1x512xf32>
    %7 = vector.broadcast %6 : vector<1x512xf32> to vector<64x512xf32>
    %c0_5 = arith.constant 0 : index
    %c0_6 = arith.constant 0 : index
    %8 = vector.load %arg3[%c0_5, %c0_6] : memref<128x512xbf16, #tpu.memory_space<vmem>>, vector<128x512xbf16>
    %cst = arith.constant dense<0.000000e+00> : vector<64x512xf32>
    %9 = tpu.matmul %4, %8, %cst {dimension_numbers = #tpu.dot_dimension_numbers<[1], [0], [0], [1], [0, 0, 1, 1], [], []>} : vector<64x128xbf16>, vector<128x512xbf16>, vector<64x512xf32> -> vector<64x512xf32>
    %10 = arith.addf %9, %7 : vector<64x512xf32>
    %11 = vector.shape_cast %10 : vector<64x512xf32> to vector<8x8x512xf32>
    %c0_7 = arith.constant 0 : index
    %c0_8 = arith.constant 0 : index
    %c0_9 = arith.constant 0 : index
    %12 = vector.load %arg11[%c0_7, %c0_8, %c0_9] : memref<8x8x512xf32, #tpu.memory_space<vmem>>, vector<8x8x512xf32>
    tpu.vector_store %arg11[%c0_7, %c0_8, %c0_9], %11 {strides = array<i32>} : memref<8x8x512xf32, #tpu.memory_space<vmem>>, vector<8x8x512xf32>,
    %c0_10 = arith.constant 0 : index
    %c0_11 = arith.constant 0 : index
    %13 = vector.load %arg4[%c0_10, %c0_11] : memref<128x512xbf16, #tpu.memory_space<vmem>>, vector<128x512xbf16>
    %c0_12 = arith.constant 0 : index
    %c0_13 = arith.constant 0 : index
    %14 = vector.load %arg9[%c0_12, %c0_13] : memref<8x128xf32, #tpu.memory_space<vmem>>, vector<8x128xf32>
    %c0_14 = arith.constant 0 : index
    %c0_15 = arith.constant 0 : index
    %15 = vector.load %arg10[%c0_14, %c0_15] : memref<8x128xf32, #tpu.memory_space<vmem>>, vector<8x128xf32>
    %c0_i32_16 = arith.constant 0 : i32
    %16 = arith.index_cast %c0_i32_16 : i32 to index
    %c0_17 = arith.constant 0 : index
    %c0_18 = arith.constant 0 : index
    %17 = vector.load %arg11[%16, %c0_17, %c0_18] : memref<8x8x512xf32, #tpu.memory_space<vmem>>, vector<1x8x512xf32>
    %18 = vector.shape_cast %17 : vector<1x8x512xf32> to vector<8x512xf32>
    %19 = arith.truncf %14 : vector<8x128xf32> to vector<8x128xbf16>
    %cst_19 = arith.constant dense<0.000000e+00> : vector<8x512xf32>
    %20 = tpu.matmul %19, %13, %cst_19 {dimension_numbers = #tpu.dot_dimension_numbers<[1], [0], [0], [1], [0, 0, 1, 1], [], []>} : vector<8x128xbf16>, vector<128x512xbf16>, vector<8x512xf32> -> vector<8x512xf32>
    %21 = arith.addf %18, %20 : vector<8x512xf32>
    %22 = vector.extract_strided_slice %21 {offsets = [0, 0], sizes = [8, 128], strides = [1, 1]} : vector<8x512xf32> to vector<8x128xf32>
    %23 = arith.negf %22 : vector<8x128xf32>
    %24 = math.exp %23 : vector<8x128xf32>
    %cst_20 = arith.constant 1.000000e+00 : f32
    %25 = vector.broadcast %cst_20 : f32 to vector<8x128xf32>
    %26 = arith.addf %25, %24 : vector<8x128xf32>
    %27 = arith.divf %25, %26 : vector<8x128xf32>
    %28 = vector.extract_strided_slice %21 {offsets = [0, 128], sizes = [8, 128], strides = [1, 1]} : vector<8x512xf32> to vector<8x128xf32>
    %29 = arith.negf %28 : vector<8x128xf32>
    %30 = math.exp %29 : vector<8x128xf32>
    %cst_21 = arith.constant 1.000000e+00 : f32
    %31 = vector.broadcast %cst_21 : f32 to vector<8x128xf32>
    %32 = arith.addf %31, %30 : vector<8x128xf32>
    %33 = arith.divf %31, %32 : vector<8x128xf32>
    %34 = vector.extract_strided_slice %21 {offsets = [0, 256], sizes = [8, 128], strides = [1, 1]} : vector<8x512xf32> to vector<8x128xf32>
    %35 = math.tanh %34 : vector<8x128xf32>
    %36 = vector.extract_strided_slice %21 {offsets = [0, 384], sizes = [8, 128], strides = [1, 1]} : vector<8x512xf32> to vector<8x128xf32>
    %37 = arith.negf %36 : vector<8x128xf32>
    %38 = math.exp %37 : vector<8x128xf32>
    %cst_22 = arith.constant 1.000000e+00 : f32
    %39 = vector.broadcast %cst_22 : f32 to vector<8x128xf32>
    %40 = arith.addf %39, %38 : vector<8x128xf32>
    %41 = arith.divf %39, %40 : vector<8x128xf32>
    %42 = arith.mulf %33, %15 : vector<8x128xf32>
    %43 = arith.mulf %27, %35 : vector<8x128xf32>
    %44 = arith.addf %42, %43 : vector<8x128xf32>
    %45 = math.tanh %44 : vector<8x128xf32>
    %46 = arith.mulf %41, %45 : vector<8x128xf32>
    %47 = arith.truncf %46 : vector<8x128xf32> to vector<8x128xbf16>
    %48 = arith.index_cast %c0_i32_16 : i32 to index
    %c0_23 = arith.constant 0 : index
    %c0_24 = arith.constant 0 : index
    %49 = vector.load %arg12[%48, %c0_23, %c0_24] : memref<8x8x128xbf16, #tpu.memory_space<vmem>>, vector<1x8x128xbf16>
    %50 = vector.shape_cast %49 : vector<1x8x128xbf16> to vector<8x128xbf16>
    %51 = vector.shape_cast %47 : vector<8x128xbf16> to vector<1x8x128xbf16>
    tpu.vector_store %arg12[%48, %c0_23, %c0_24], %51 {strides = array<i32>} : memref<8x8x128xbf16, #tpu.memory_space<vmem>>, vector<1x8x128xbf16>,
    %c1_i32 = arith.constant 1 : i32
    %52 = arith.index_cast %c1_i32 : i32 to index
    %c0_25 = arith.constant 0 : index
    %c0_26 = arith.constant 0 : index
    %53 = vector.load %arg11[%52, %c0_25, %c0_26] : memref<8x8x512xf32, #tpu.memory_space<vmem>>, vector<1x8x512xf32>
    %54 = vector.shape_cast %53 : vector<1x8x512xf32> to vector<8x512xf32>
    %55 = arith.truncf %46 : vector<8x128xf32> to vector<8x128xbf16>
    %cst_27 = arith.constant dense<0.000000e+00> : vector<8x512xf32>
    %56 = tpu.matmul %55, %13, %cst_27 {dimension_numbers = #tpu.dot_dimension_numbers<[1], [0], [0], [1], [0, 0, 1, 1], [], []>} : vector<8x128xbf16>, vector<128x512xbf16>, vector<8x512xf32> -> vector<8x512xf32>
    %57 = arith.addf %54, %56 : vector<8x512xf32>
    %58 = vector.extract_strided_slice %57 {offsets = [0, 0], sizes = [8, 128], strides = [1, 1]} : vector<8x512xf32> to vector<8x128xf32>
    %59 = arith.negf %58 : vector<8x128xf32>
    %60 = math.exp %59 : vector<8x128xf32>
    %cst_28 = arith.constant 1.000000e+00 : f32
    %61 = vector.broadcast %cst_28 : f32 to vector<8x128xf32>
    %62 = arith.addf %61, %60 : vector<8x128xf32>
    %63 = arith.divf %61, %62 : vector<8x128xf32>
    %64 = vector.extract_strided_slice %57 {offsets = [0, 128], sizes = [8, 128], strides = [1, 1]} : vector<8x512xf32> to vector<8x128xf32>
    %65 = arith.negf %64 : vector<8x128xf32>
    %66 = math.exp %65 : vector<8x128xf32>
    %cst_29 = arith.constant 1.000000e+00 : f32
    %67 = vector.broadcast %cst_29 : f32 to vector<8x128xf32>
    %68 = arith.addf %67, %66 : vector<8x128xf32>
    %69 = arith.divf %67, %68 : vector<8x128xf32>
    %70 = vector.extract_strided_slice %57 {offsets = [0, 256], sizes = [8, 128], strides = [1, 1]} : vector<8x512xf32> to vector<8x128xf32>
    %71 = math.tanh %70 : vector<8x128xf32>
    %72 = vector.extract_strided_slice %57 {offsets = [0, 384], sizes = [8, 128], strides = [1, 1]} : vector<8x512xf32> to vector<8x128xf32>
    %73 = arith.negf %72 : vector<8x128xf32>
    %74 = math.exp %73 : vector<8x128xf32>
    %cst_30 = arith.constant 1.000000e+00 : f32
    %75 = vector.broadcast %cst_30 : f32 to vector<8x128xf32>
    %76 = arith.addf %75, %74 : vector<8x128xf32>
    %77 = arith.divf %75, %76 : vector<8x128xf32>
    %78 = arith.mulf %69, %44 : vector<8x128xf32>
    %79 = arith.mulf %63, %71 : vector<8x128xf32>
    %80 = arith.addf %78, %79 : vector<8x128xf32>
    %81 = math.tanh %80 : vector<8x128xf32>
    %82 = arith.mulf %77, %81 : vector<8x128xf32>
    %83 = arith.truncf %82 : vector<8x128xf32> to vector<8x128xbf16>
    %84 = arith.index_cast %c1_i32 : i32 to index
    %c0_31 = arith.constant 0 : index
    %c0_32 = arith.constant 0 : index
    %85 = vector.load %arg12[%84, %c0_31, %c0_32] : memref<8x8x128xbf16, #tpu.memory_space<vmem>>, vector<1x8x128xbf16>
    %86 = vector.shape_cast %85 : vector<1x8x128xbf16> to vector<8x128xbf16>
    %87 = vector.shape_cast %83 : vector<8x128xbf16> to vector<1x8x128xbf16>
    tpu.vector_store %arg12[%84, %c0_31, %c0_32], %87 {strides = array<i32>} : memref<8x8x128xbf16, #tpu.memory_space<vmem>>, vector<1x8x128xbf16>,
    %c2_i32 = arith.constant 2 : i32
    %88 = arith.index_cast %c2_i32 : i32 to index
    %c0_33 = arith.constant 0 : index
    %c0_34 = arith.constant 0 : index
    %89 = vector.load %arg11[%88, %c0_33, %c0_34] : memref<8x8x512xf32, #tpu.memory_space<vmem>>, vector<1x8x512xf32>
    %90 = vector.shape_cast %89 : vector<1x8x512xf32> to vector<8x512xf32>
    %91 = arith.truncf %82 : vector<8x128xf32> to vector<8x128xbf16>
    %cst_35 = arith.constant dense<0.000000e+00> : vector<8x512xf32>
    %92 = tpu.matmul %91, %13, %cst_35 {dimension_numbers = #tpu.dot_dimension_numbers<[1], [0], [0], [1], [0, 0, 1, 1], [], []>} : vector<8x128xbf16>, vector<128x512xbf16>, vector<8x512xf32> -> vector<8x512xf32>
    %93 = arith.addf %90, %92 : vector<8x512xf32>
    %94 = vector.extract_strided_slice %93 {offsets = [0, 0], sizes = [8, 128], strides = [1, 1]} : vector<8x512xf32> to vector<8x128xf32>
    %95 = arith.negf %94 : vector<8x128xf32>
    %96 = math.exp %95 : vector<8x128xf32>
    %cst_36 = arith.constant 1.000000e+00 : f32
    %97 = vector.broadcast %cst_36 : f32 to vector<8x128xf32>
    %98 = arith.addf %97, %96 : vector<8x128xf32>
    %99 = arith.divf %97, %98 : vector<8x128xf32>
    %100 = vector.extract_strided_slice %93 {offsets = [0, 128], sizes = [8, 128], strides = [1, 1]} : vector<8x512xf32> to vector<8x128xf32>
    %101 = arith.negf %100 : vector<8x128xf32>
    %102 = math.exp %101 : vector<8x128xf32>
    %cst_37 = arith.constant 1.000000e+00 : f32
    %103 = vector.broadcast %cst_37 : f32 to vector<8x128xf32>
    %104 = arith.addf %103, %102 : vector<8x128xf32>
    %105 = arith.divf %103, %104 : vector<8x128xf32>
    %106 = vector.extract_strided_slice %93 {offsets = [0, 256], sizes = [8, 128], strides = [1, 1]} : vector<8x512xf32> to vector<8x128xf32>
    %107 = math.tanh %106 : vector<8x128xf32>
    %108 = vector.extract_strided_slice %93 {offsets = [0, 384], sizes = [8, 128], strides = [1, 1]} : vector<8x512xf32> to vector<8x128xf32>
    %109 = arith.negf %108 : vector<8x128xf32>
    %110 = math.exp %109 : vector<8x128xf32>
    %cst_38 = arith.constant 1.000000e+00 : f32
    %111 = vector.broadcast %cst_38 : f32 to vector<8x128xf32>
    %112 = arith.addf %111, %110 : vector<8x128xf32>
    %113 = arith.divf %111, %112 : vector<8x128xf32>
    %114 = arith.mulf %105, %80 : vector<8x128xf32>
    %115 = arith.mulf %99, %107 : vector<8x128xf32>
    %116 = arith.addf %114, %115 : vector<8x128xf32>
    %117 = math.tanh %116 : vector<8x128xf32>
    %118 = arith.mulf %113, %117 : vector<8x128xf32>
    %119 = arith.truncf %118 : vector<8x128xf32> to vector<8x128xbf16>
    %120 = arith.index_cast %c2_i32 : i32 to index
    %c0_39 = arith.constant 0 : index
    %c0_40 = arith.constant 0 : index
    %121 = vector.load %arg12[%120, %c0_39, %c0_40] : memref<8x8x128xbf16, #tpu.memory_space<vmem>>, vector<1x8x128xbf16>
    %122 = vector.shape_cast %121 : vector<1x8x128xbf16> to vector<8x128xbf16>
    %123 = vector.shape_cast %119 : vector<8x128xbf16> to vector<1x8x128xbf16>
    tpu.vector_store %arg12[%120, %c0_39, %c0_40], %123 {strides = array<i32>} : memref<8x8x128xbf16, #tpu.memory_space<vmem>>, vector<1x8x128xbf16>,
    %c3_i32 = arith.constant 3 : i32
    %124 = arith.index_cast %c3_i32 : i32 to index
    %c0_41 = arith.constant 0 : index
    %c0_42 = arith.constant 0 : index
    %125 = vector.load %arg11[%124, %c0_41, %c0_42] : memref<8x8x512xf32, #tpu.memory_space<vmem>>, vector<1x8x512xf32>
    %126 = vector.shape_cast %125 : vector<1x8x512xf32> to vector<8x512xf32>
    %127 = arith.truncf %118 : vector<8x128xf32> to vector<8x128xbf16>
    %cst_43 = arith.constant dense<0.000000e+00> : vector<8x512xf32>
    %128 = tpu.matmul %127, %13, %cst_43 {dimension_numbers = #tpu.dot_dimension_numbers<[1], [0], [0], [1], [0, 0, 1, 1], [], []>} : vector<8x128xbf16>, vector<128x512xbf16>, vector<8x512xf32> -> vector<8x512xf32>
    %129 = arith.addf %126, %128 : vector<8x512xf32>
    %130 = vector.extract_strided_slice %129 {offsets = [0, 0], sizes = [8, 128], strides = [1, 1]} : vector<8x512xf32> to vector<8x128xf32>
    %131 = arith.negf %130 : vector<8x128xf32>
    %132 = math.exp %131 : vector<8x128xf32>
    %cst_44 = arith.constant 1.000000e+00 : f32
    %133 = vector.broadcast %cst_44 : f32 to vector<8x128xf32>
    %134 = arith.addf %133, %132 : vector<8x128xf32>
    %135 = arith.divf %133, %134 : vector<8x128xf32>
    %136 = vector.extract_strided_slice %129 {offsets = [0, 128], sizes = [8, 128], strides = [1, 1]} : vector<8x512xf32> to vector<8x128xf32>
    %137 = arith.negf %136 : vector<8x128xf32>
    %138 = math.exp %137 : vector<8x128xf32>
    %cst_45 = arith.constant 1.000000e+00 : f32
    %139 = vector.broadcast %cst_45 : f32 to vector<8x128xf32>
    %140 = arith.addf %139, %138 : vector<8x128xf32>
    %141 = arith.divf %139, %140 : vector<8x128xf32>
    %142 = vector.extract_strided_slice %129 {offsets = [0, 256], sizes = [8, 128], strides = [1, 1]} : vector<8x512xf32> to vector<8x128xf32>
    %143 = math.tanh %142 : vector<8x128xf32>
    %144 = vector.extract_strided_slice %129 {offsets = [0, 384], sizes = [8, 128], strides = [1, 1]} : vector<8x512xf32> to vector<8x128xf32>
    %145 = arith.negf %144 : vector<8x128xf32>
    %146 = math.exp %145 : vector<8x128xf32>
    %cst_46 = arith.constant 1.000000e+00 : f32
    %147 = vector.broadcast %cst_46 : f32 to vector<8x128xf32>
    %148 = arith.addf %147, %146 : vector<8x128xf32>
    %149 = arith.divf %147, %148 : vector<8x128xf32>
    %150 = arith.mulf %141, %116 : vector<8x128xf32>
    %151 = arith.mulf %135, %143 : vector<8x128xf32>
    %152 = arith.addf %150, %151 : vector<8x128xf32>
    %153 = math.tanh %152 : vector<8x128xf32>
    %154 = arith.mulf %149, %153 : vector<8x128xf32>
    %155 = arith.truncf %154 : vector<8x128xf32> to vector<8x128xbf16>
    %156 = arith.index_cast %c3_i32 : i32 to index
    %c0_47 = arith.constant 0 : index
    %c0_48 = arith.constant 0 : index
    %157 = vector.load %arg12[%156, %c0_47, %c0_48] : memref<8x8x128xbf16, #tpu.memory_space<vmem>>, vector<1x8x128xbf16>
    %158 = vector.shape_cast %157 : vector<1x8x128xbf16> to vector<8x128xbf16>
    %159 = vector.shape_cast %155 : vector<8x128xbf16> to vector<1x8x128xbf16>
    tpu.vector_store %arg12[%156, %c0_47, %c0_48], %159 {strides = array<i32>} : memref<8x8x128xbf16, #tpu.memory_space<vmem>>, vector<1x8x128xbf16>,
    %c4_i32 = arith.constant 4 : i32
    %160 = arith.index_cast %c4_i32 : i32 to index
    %c0_49 = arith.constant 0 : index
    %c0_50 = arith.constant 0 : index
    %161 = vector.load %arg11[%160, %c0_49, %c0_50] : memref<8x8x512xf32, #tpu.memory_space<vmem>>, vector<1x8x512xf32>
    %162 = vector.shape_cast %161 : vector<1x8x512xf32> to vector<8x512xf32>
    %163 = arith.truncf %154 : vector<8x128xf32> to vector<8x128xbf16>
    %cst_51 = arith.constant dense<0.000000e+00> : vector<8x512xf32>
    %164 = tpu.matmul %163, %13, %cst_51 {dimension_numbers = #tpu.dot_dimension_numbers<[1], [0], [0], [1], [0, 0, 1, 1], [], []>} : vector<8x128xbf16>, vector<128x512xbf16>, vector<8x512xf32> -> vector<8x512xf32>
    %165 = arith.addf %162, %164 : vector<8x512xf32>
    %166 = vector.extract_strided_slice %165 {offsets = [0, 0], sizes = [8, 128], strides = [1, 1]} : vector<8x512xf32> to vector<8x128xf32>
    %167 = arith.negf %166 : vector<8x128xf32>
    %168 = math.exp %167 : vector<8x128xf32>
    %cst_52 = arith.constant 1.000000e+00 : f32
    %169 = vector.broadcast %cst_52 : f32 to vector<8x128xf32>
    %170 = arith.addf %169, %168 : vector<8x128xf32>
    %171 = arith.divf %169, %170 : vector<8x128xf32>
    %172 = vector.extract_strided_slice %165 {offsets = [0, 128], sizes = [8, 128], strides = [1, 1]} : vector<8x512xf32> to vector<8x128xf32>
    %173 = arith.negf %172 : vector<8x128xf32>
    %174 = math.exp %173 : vector<8x128xf32>
    %cst_53 = arith.constant 1.000000e+00 : f32
    %175 = vector.broadcast %cst_53 : f32 to vector<8x128xf32>
    %176 = arith.addf %175, %174 : vector<8x128xf32>
    %177 = arith.divf %175, %176 : vector<8x128xf32>
    %178 = vector.extract_strided_slice %165 {offsets = [0, 256], sizes = [8, 128], strides = [1, 1]} : vector<8x512xf32> to vector<8x128xf32>
    %179 = math.tanh %178 : vector<8x128xf32>
    %180 = vector.extract_strided_slice %165 {offsets = [0, 384], sizes = [8, 128], strides = [1, 1]} : vector<8x512xf32> to vector<8x128xf32>
    %181 = arith.negf %180 : vector<8x128xf32>
    %182 = math.exp %181 : vector<8x128xf32>
    %cst_54 = arith.constant 1.000000e+00 : f32
    %183 = vector.broadcast %cst_54 : f32 to vector<8x128xf32>
    %184 = arith.addf %183, %182 : vector<8x128xf32>
    %185 = arith.divf %183, %184 : vector<8x128xf32>
    %186 = arith.mulf %177, %152 : vector<8x128xf32>
    %187 = arith.mulf %171, %179 : vector<8x128xf32>
    %188 = arith.addf %186, %187 : vector<8x128xf32>
    %189 = math.tanh %188 : vector<8x128xf32>
    %190 = arith.mulf %185, %189 : vector<8x128xf32>
    %191 = arith.truncf %190 : vector<8x128xf32> to vector<8x128xbf16>
    %192 = arith.index_cast %c4_i32 : i32 to index
    %c0_55 = arith.constant 0 : index
    %c0_56 = arith.constant 0 : index
    %193 = vector.load %arg12[%192, %c0_55, %c0_56] : memref<8x8x128xbf16, #tpu.memory_space<vmem>>, vector<1x8x128xbf16>
    %194 = vector.shape_cast %193 : vector<1x8x128xbf16> to vector<8x128xbf16>
    %195 = vector.shape_cast %191 : vector<8x128xbf16> to vector<1x8x128xbf16>
    tpu.vector_store %arg12[%192, %c0_55, %c0_56], %195 {strides = array<i32>} : memref<8x8x128xbf16, #tpu.memory_space<vmem>>, vector<1x8x128xbf16>,
    %c5_i32 = arith.constant 5 : i32
    %196 = arith.index_cast %c5_i32 : i32 to index
    %c0_57 = arith.constant 0 : index
    %c0_58 = arith.constant 0 : index
    %197 = vector.load %arg11[%196, %c0_57, %c0_58] : memref<8x8x512xf32, #tpu.memory_space<vmem>>, vector<1x8x512xf32>
    %198 = vector.shape_cast %197 : vector<1x8x512xf32> to vector<8x512xf32>
    %199 = arith.truncf %190 : vector<8x128xf32> to vector<8x128xbf16>
    %cst_59 = arith.constant dense<0.000000e+00> : vector<8x512xf32>
    %200 = tpu.matmul %199, %13, %cst_59 {dimension_numbers = #tpu.dot_dimension_numbers<[1], [0], [0], [1], [0, 0, 1, 1], [], []>} : vector<8x128xbf16>, vector<128x512xbf16>, vector<8x512xf32> -> vector<8x512xf32>
    %201 = arith.addf %198, %200 : vector<8x512xf32>
    %202 = vector.extract_strided_slice %201 {offsets = [0, 0], sizes = [8, 128], strides = [1, 1]} : vector<8x512xf32> to vector<8x128xf32>
    %203 = arith.negf %202 : vector<8x128xf32>
    %204 = math.exp %203 : vector<8x128xf32>
    %cst_60 = arith.constant 1.000000e+00 : f32
    %205 = vector.broadcast %cst_60 : f32 to vector<8x128xf32>
    %206 = arith.addf %205, %204 : vector<8x128xf32>
    %207 = arith.divf %205, %206 : vector<8x128xf32>
    %208 = vector.extract_strided_slice %201 {offsets = [0, 128], sizes = [8, 128], strides = [1, 1]} : vector<8x512xf32> to vector<8x128xf32>
    %209 = arith.negf %208 : vector<8x128xf32>
    %210 = math.exp %209 : vector<8x128xf32>
    %cst_61 = arith.constant 1.000000e+00 : f32
    %211 = vector.broadcast %cst_61 : f32 to vector<8x128xf32>
    %212 = arith.addf %211, %210 : vector<8x128xf32>
    %213 = arith.divf %211, %212 : vector<8x128xf32>
    %214 = vector.extract_strided_slice %201 {offsets = [0, 256], sizes = [8, 128], strides = [1, 1]} : vector<8x512xf32> to vector<8x128xf32>
    %215 = math.tanh %214 : vector<8x128xf32>
    %216 = vector.extract_strided_slice %201 {offsets = [0, 384], sizes = [8, 128], strides = [1, 1]} : vector<8x512xf32> to vector<8x128xf32>
    %217 = arith.negf %216 : vector<8x128xf32>
    %218 = math.exp %217 : vector<8x128xf32>
    %cst_62 = arith.constant 1.000000e+00 : f32
    %219 = vector.broadcast %cst_62 : f32 to vector<8x128xf32>
    %220 = arith.addf %219, %218 : vector<8x128xf32>
    %221 = arith.divf %219, %220 : vector<8x128xf32>
    %222 = arith.mulf %213, %188 : vector<8x128xf32>
    %223 = arith.mulf %207, %215 : vector<8x128xf32>
    %224 = arith.addf %222, %223 : vector<8x128xf32>
    %225 = math.tanh %224 : vector<8x128xf32>
    %226 = arith.mulf %221, %225 : vector<8x128xf32>
    %227 = arith.truncf %226 : vector<8x128xf32> to vector<8x128xbf16>
    %228 = arith.index_cast %c5_i32 : i32 to index
    %c0_63 = arith.constant 0 : index
    %c0_64 = arith.constant 0 : index
    %229 = vector.load %arg12[%228, %c0_63, %c0_64] : memref<8x8x128xbf16, #tpu.memory_space<vmem>>, vector<1x8x128xbf16>
    %230 = vector.shape_cast %229 : vector<1x8x128xbf16> to vector<8x128xbf16>
    %231 = vector.shape_cast %227 : vector<8x128xbf16> to vector<1x8x128xbf16>
    tpu.vector_store %arg12[%228, %c0_63, %c0_64], %231 {strides = array<i32>} : memref<8x8x128xbf16, #tpu.memory_space<vmem>>, vector<1x8x128xbf16>,
    %c6_i32 = arith.constant 6 : i32
    %232 = arith.index_cast %c6_i32 : i32 to index
    %c0_65 = arith.constant 0 : index
    %c0_66 = arith.constant 0 : index
    %233 = vector.load %arg11[%232, %c0_65, %c0_66] : memref<8x8x512xf32, #tpu.memory_space<vmem>>, vector<1x8x512xf32>
    %234 = vector.shape_cast %233 : vector<1x8x512xf32> to vector<8x512xf32>
    %235 = arith.truncf %226 : vector<8x128xf32> to vector<8x128xbf16>
    %cst_67 = arith.constant dense<0.000000e+00> : vector<8x512xf32>
    %236 = tpu.matmul %235, %13, %cst_67 {dimension_numbers = #tpu.dot_dimension_numbers<[1], [0], [0], [1], [0, 0, 1, 1], [], []>} : vector<8x128xbf16>, vector<128x512xbf16>, vector<8x512xf32> -> vector<8x512xf32>
    %237 = arith.addf %234, %236 : vector<8x512xf32>
    %238 = vector.extract_strided_slice %237 {offsets = [0, 0], sizes = [8, 128], strides = [1, 1]} : vector<8x512xf32> to vector<8x128xf32>
    %239 = arith.negf %238 : vector<8x128xf32>
    %240 = math.exp %239 : vector<8x128xf32>
    %cst_68 = arith.constant 1.000000e+00 : f32
    %241 = vector.broadcast %cst_68 : f32 to vector<8x128xf32>
    %242 = arith.addf %241, %240 : vector<8x128xf32>
    %243 = arith.divf %241, %242 : vector<8x128xf32>
    %244 = vector.extract_strided_slice %237 {offsets = [0, 128], sizes = [8, 128], strides = [1, 1]} : vector<8x512xf32> to vector<8x128xf32>
    %245 = arith.negf %244 : vector<8x128xf32>
    %246 = math.exp %245 : vector<8x128xf32>
    %cst_69 = arith.constant 1.000000e+00 : f32
    %247 = vector.broadcast %cst_69 : f32 to vector<8x128xf32>
    %248 = arith.addf %247, %246 : vector<8x128xf32>
    %249 = arith.divf %247, %248 : vector<8x128xf32>
    %250 = vector.extract_strided_slice %237 {offsets = [0, 256], sizes = [8, 128], strides = [1, 1]} : vector<8x512xf32> to vector<8x128xf32>
    %251 = math.tanh %250 : vector<8x128xf32>
    %252 = vector.extract_strided_slice %237 {offsets = [0, 384], sizes = [8, 128], strides = [1, 1]} : vector<8x512xf32> to vector<8x128xf32>
    %253 = arith.negf %252 : vector<8x128xf32>
    %254 = math.exp %253 : vector<8x128xf32>
    %cst_70 = arith.constant 1.000000e+00 : f32
    %255 = vector.broadcast %cst_70 : f32 to vector<8x128xf32>
    %256 = arith.addf %255, %254 : vector<8x128xf32>
    %257 = arith.divf %255, %256 : vector<8x128xf32>
    %258 = arith.mulf %249, %224 : vector<8x128xf32>
    %259 = arith.mulf %243, %251 : vector<8x128xf32>
    %260 = arith.addf %258, %259 : vector<8x128xf32>
    %261 = math.tanh %260 : vector<8x128xf32>
    %262 = arith.mulf %257, %261 : vector<8x128xf32>
    %263 = arith.truncf %262 : vector<8x128xf32> to vector<8x128xbf16>
    %264 = arith.index_cast %c6_i32 : i32 to index
    %c0_71 = arith.constant 0 : index
    %c0_72 = arith.constant 0 : index
    %265 = vector.load %arg12[%264, %c0_71, %c0_72] : memref<8x8x128xbf16, #tpu.memory_space<vmem>>, vector<1x8x128xbf16>
    %266 = vector.shape_cast %265 : vector<1x8x128xbf16> to vector<8x128xbf16>
    %267 = vector.shape_cast %263 : vector<8x128xbf16> to vector<1x8x128xbf16>
    tpu.vector_store %arg12[%264, %c0_71, %c0_72], %267 {strides = array<i32>} : memref<8x8x128xbf16, #tpu.memory_space<vmem>>, vector<1x8x128xbf16>,
    %c7_i32 = arith.constant 7 : i32
    %268 = arith.index_cast %c7_i32 : i32 to index
    %c0_73 = arith.constant 0 : index
    %c0_74 = arith.constant 0 : index
    %269 = vector.load %arg11[%268, %c0_73, %c0_74] : memref<8x8x512xf32, #tpu.memory_space<vmem>>, vector<1x8x512xf32>
    %270 = vector.shape_cast %269 : vector<1x8x512xf32> to vector<8x512xf32>
    %271 = arith.truncf %262 : vector<8x128xf32> to vector<8x128xbf16>
    %cst_75 = arith.constant dense<0.000000e+00> : vector<8x512xf32>
    %272 = tpu.matmul %271, %13, %cst_75 {dimension_numbers = #tpu.dot_dimension_numbers<[1], [0], [0], [1], [0, 0, 1, 1], [], []>} : vector<8x128xbf16>, vector<128x512xbf16>, vector<8x512xf32> -> vector<8x512xf32>
    %273 = arith.addf %270, %272 : vector<8x512xf32>
    %274 = vector.extract_strided_slice %273 {offsets = [0, 0], sizes = [8, 128], strides = [1, 1]} : vector<8x512xf32> to vector<8x128xf32>
    %275 = arith.negf %274 : vector<8x128xf32>
    %276 = math.exp %275 : vector<8x128xf32>
    %cst_76 = arith.constant 1.000000e+00 : f32
    %277 = vector.broadcast %cst_76 : f32 to vector<8x128xf32>
    %278 = arith.addf %277, %276 : vector<8x128xf32>
    %279 = arith.divf %277, %278 : vector<8x128xf32>
    %280 = vector.extract_strided_slice %273 {offsets = [0, 128], sizes = [8, 128], strides = [1, 1]} : vector<8x512xf32> to vector<8x128xf32>
    %281 = arith.negf %280 : vector<8x128xf32>
    %282 = math.exp %281 : vector<8x128xf32>
    %cst_77 = arith.constant 1.000000e+00 : f32
    %283 = vector.broadcast %cst_77 : f32 to vector<8x128xf32>
    %284 = arith.addf %283, %282 : vector<8x128xf32>
    %285 = arith.divf %283, %284 : vector<8x128xf32>
    %286 = vector.extract_strided_slice %273 {offsets = [0, 256], sizes = [8, 128], strides = [1, 1]} : vector<8x512xf32> to vector<8x128xf32>
    %287 = math.tanh %286 : vector<8x128xf32>
    %288 = vector.extract_strided_slice %273 {offsets = [0, 384], sizes = [8, 128], strides = [1, 1]} : vector<8x512xf32> to vector<8x128xf32>
    %289 = arith.negf %288 : vector<8x128xf32>
    %290 = math.exp %289 : vector<8x128xf32>
    %cst_78 = arith.constant 1.000000e+00 : f32
    %291 = vector.broadcast %cst_78 : f32 to vector<8x128xf32>
    %292 = arith.addf %291, %290 : vector<8x128xf32>
    %293 = arith.divf %291, %292 : vector<8x128xf32>
    %294 = arith.mulf %285, %260 : vector<8x128xf32>
    %295 = arith.mulf %279, %287 : vector<8x128xf32>
    %296 = arith.addf %294, %295 : vector<8x128xf32>
    %297 = math.tanh %296 : vector<8x128xf32>
    %298 = arith.mulf %293, %297 : vector<8x128xf32>
    %299 = arith.truncf %298 : vector<8x128xf32> to vector<8x128xbf16>
    %300 = arith.index_cast %c7_i32 : i32 to index
    %c0_79 = arith.constant 0 : index
    %c0_80 = arith.constant 0 : index
    %301 = vector.load %arg12[%300, %c0_79, %c0_80] : memref<8x8x128xbf16, #tpu.memory_space<vmem>>, vector<1x8x128xbf16>
    %302 = vector.shape_cast %301 : vector<1x8x128xbf16> to vector<8x128xbf16>
    %303 = vector.shape_cast %299 : vector<8x128xbf16> to vector<1x8x128xbf16>
    tpu.vector_store %arg12[%300, %c0_79, %c0_80], %303 {strides = array<i32>} : memref<8x8x128xbf16, #tpu.memory_space<vmem>>, vector<1x8x128xbf16>,
    %c8_i32 = arith.constant 8 : i32
    %c0_81 = arith.constant 0 : index
    %c0_82 = arith.constant 0 : index
    %304 = vector.load %arg9[%c0_81, %c0_82] : memref<8x128xf32, #tpu.memory_space<vmem>>, vector<8x128xf32>
    tpu.vector_store %arg9[%c0_81, %c0_82], %298 {strides = array<i32>} : memref<8x128xf32, #tpu.memory_space<vmem>>, vector<8x128xf32>,
    %c0_83 = arith.constant 0 : index
    %c0_84 = arith.constant 0 : index
    %305 = vector.load %arg10[%c0_83, %c0_84] : memref<8x128xf32, #tpu.memory_space<vmem>>, vector<8x128xf32>
    tpu.vector_store %arg10[%c0_83, %c0_84], %296 {strides = array<i32>} : memref<8x128xf32, #tpu.memory_space<vmem>>, vector<8x128xf32>,
    %c0_85 = arith.constant 0 : index
    %c0_86 = arith.constant 0 : index
    %c0_87 = arith.constant 0 : index
    %306 = vector.load %arg12[%c0_85, %c0_86, %c0_87] : memref<8x8x128xbf16, #tpu.memory_space<vmem>>, vector<8x8x128xbf16>
    %307 = vector.shape_cast %306 : vector<8x8x128xbf16> to vector<64x128xbf16>
    %c0_88 = arith.constant 0 : index
    %c0_89 = arith.constant 0 : index
    %308 = vector.load %arg7[%c0_88, %c0_89] : memref<1x128xf32, #tpu.memory_space<vmem>>, vector<1x128xf32>
    %309 = vector.shape_cast %308 : vector<1x128xf32> to vector<1x128xf32>
    %310 = vector.broadcast %309 : vector<1x128xf32> to vector<64x128xf32>
    %c0_90 = arith.constant 0 : index
    %c0_91 = arith.constant 0 : index
    %311 = vector.load %arg6[%c0_90, %c0_91] : memref<128x128xbf16, #tpu.memory_space<vmem>>, vector<128x128xbf16>
    %cst_92 = arith.constant dense<0.000000e+00> : vector<64x128xf32>
    %312 = tpu.matmul %307, %311, %cst_92 {dimension_numbers = #tpu.dot_dimension_numbers<[1], [0], [0], [1], [0, 0, 1, 1], [], []>} : vector<64x128xbf16>, vector<128x128xbf16>, vector<64x128xf32> -> vector<64x128xf32>
    %313 = arith.addf %312, %310 : vector<64x128xf32>
    %314 = vector.shape_cast %313 : vector<64x128xf32> to vector<8x8x128xf32>
    %315 = arith.truncf %314 : vector<8x8x128xf32> to vector<8x8x128xbf16>
    %c0_93 = arith.constant 0 : index
    %c0_94 = arith.constant 0 : index
    %c0_95 = arith.constant 0 : index
    %316 = vector.load %arg8[%c0_93, %c0_94, %c0_95] : memref<8x8x128xbf16, #tpu.memory_space<vmem>>, vector<8x8x128xbf16>
    tpu.vector_store %arg8[%c0_93, %c0_94, %c0_95], %315 {strides = array<i32>} : memref<8x8x128xbf16, #tpu.memory_space<vmem>>, vector<8x8x128xbf16>,
    return
  }
  func.func @transform_0(%arg0: i32, %arg1: i32) -> (i32, i32, i32) {
    %c0_i32 = arith.constant 0 : i32
    %c0_i32_0 = arith.constant 0 : i32
    return %arg1, %arg0, %c0_i32 : i32, i32, i32
  }
  func.func @transform_1(%arg0: i32, %arg1: i32) -> (i32, i32) {
    %c0_i32 = arith.constant 0 : i32
    %c0_i32_0 = arith.constant 0 : i32
    %c0_i32_1 = arith.constant 0 : i32
    return %c0_i32, %c0_i32_0 : i32, i32
  }
  func.func @transform_2(%arg0: i32, %arg1: i32) -> (i32, i32) {
    %c0_i32 = arith.constant 0 : i32
    %c0_i32_0 = arith.constant 0 : i32
    %c0_i32_1 = arith.constant 0 : i32
    return %c0_i32, %c0_i32_0 : i32, i32
  }
  func.func @transform_3(%arg0: i32, %arg1: i32) -> (i32, i32) {
    %c0_i32 = arith.constant 0 : i32
    %c0_i32_0 = arith.constant 0 : i32
    %c0_i32_1 = arith.constant 0 : i32
    return %c0_i32, %c0_i32_0 : i32, i32
  }
  func.func @transform_4(%arg0: i32, %arg1: i32) -> (i32, i32) {
    %c0_i32 = arith.constant 0 : i32
    %c0_i32_0 = arith.constant 0 : i32
    %c0_i32_1 = arith.constant 0 : i32
    return %c0_i32, %c0_i32_0 : i32, i32
  }
  func.func @transform_5(%arg0: i32, %arg1: i32) -> (i32, i32) {
    %c0_i32 = arith.constant 0 : i32
    %c0_i32_0 = arith.constant 0 : i32
    %c0_i32_1 = arith.constant 0 : i32
    return %c0_i32, %c0_i32_0 : i32, i32
  }
  func.func @transform_6(%arg0: i32, %arg1: i32) -> (i32, i32, i32) {
    %c0_i32 = arith.constant 0 : i32
    %c0_i32_0 = arith.constant 0 : i32
    return %arg1, %arg0, %c0_i32 : i32, i32, i32
  }
  func.func @transform_7(%arg0: i32, %arg1: i32) -> (i32, i32) {
    %c0_i32 = arith.constant 0 : i32
    %c0_i32_0 = arith.constant 0 : i32
    return %arg0, %c0_i32 : i32, i32
  }
  func.func @transform_8(%arg0: i32, %arg1: i32) -> (i32, i32) {
    %c0_i32 = arith.constant 0 : i32
    %c0_i32_0 = arith.constant 0 : i32
    return %arg0, %c0_i32 : i32, i32
  }
}

</mosaic_0001>

<llo_original>
// kernel: lstm_forward.1
$region0: #{lstm_forward.1}
  #allocation0 [shape = 'u32[]', space=smem, size = 0x4, offset = 0x4, fixed_abs, tag = 'smem constant byte address 0x4 - core index']
  #allocation1 [shape = 'u32[144,128]{1,0:T(1,128)}', space=vmem, size = 0x12000, scoped, tag = 'internal scratch']
  #allocation2 [shape = 'f32[8,8,512]{2,1,0:T(8,128)}', space=vmem, size = 0x20000, scoped, tag = 'scratch operand']
  #allocation3 [shape = 'bf16[8,8,128]{2,1,0:T(8,128)(2,1)}', space=vmem, size = 0x4000, scoped, tag = 'scratch operand']
  %s0 = inlined_call_operand.vmem [shape: bf16[8,8,128], index: 0, kind: input, shape index: {}]
  %s1 = inlined_call_operand.vmem [shape: bf16[128,512], index: 1, kind: input, shape index: {}]
  %s2 = inlined_call_operand.vmem [shape: bf16[128,512], index: 2, kind: input, shape index: {}]
  %s3 = inlined_call_operand.vmem [shape: f32[1,512], index: 3, kind: input, shape index: {}]
  %s4 = inlined_call_operand.vmem [shape: bf16[128,128], index: 4, kind: input, shape index: {}]
  %s5 = inlined_call_operand.vmem [shape: f32[1,128], index: 5, kind: input, shape index: {}]
  %s6 = inlined_call_operand.vmem [shape: bf16[8,8,128], index: 6, kind: output, shape index: {0}]
  %s7 = inlined_call_operand.vmem [shape: f32[8,128], index: 7, kind: output, shape index: {1}]
  %s8 = inlined_call_operand.vmem [shape: f32[8,128], index: 8, kind: output, shape index: {2}]
  %9 = xla_tuple %s6, %s7, %s8
  %s10 = sld [smem:[#allocation0]]
  $region54: #{lstm_forward.1} parent=0
    _
  %s12 = ssub.s32 1, %s10
  %s13 = scalar_select 0, %s12, %s10
  // Predicated region
  $region2: #{lstm_forward.1} parent=0 // pred_check
    _
  $region3: #{lstm_forward.1} parent=0 // pred_check_branch
    %15 = sbr.rel (0) target = $region5
  $region4: #{lstm_forward.1} parent=0 // pred_region
    _
  $region5: #{lstm_forward.1} parent=0 // pred_fallthru
    _
  // Predicated region
  $region6: #{lstm_forward.1} parent=0 // pred_check
    _
  $region7: #{lstm_forward.1} parent=0 // pred_check_branch
    %17 = sbr.rel (0) target = $region9
  $region8: #{lstm_forward.1} parent=0 // pred_region
    _
  $region9: #{lstm_forward.1} parent=0 // pred_fallthru
    _
  // Predicated region
  $region10: #{lstm_forward.1} parent=0 // pred_check
    _
  $region11: #{lstm_forward.1} parent=0 // pred_check_branch
    %19 = sbr.rel (0) target = $region13
  $region12: #{lstm_forward.1} parent=0 // pred_region
    _
  $region13: #{lstm_forward.1} parent=0 // pred_fallthru
    _
  // Predicated region
  $region14: #{lstm_forward.1} parent=0 // pred_check
    _
  $region15: #{lstm_forward.1} parent=0 // pred_check_branch
    %21 = sbr.rel (0) target = $region17
  $region16: #{lstm_forward.1} parent=0 // pred_region
    _
  $region17: #{lstm_forward.1} parent=0 // pred_fallthru
    _
  // Predicated region
  $region18: #{lstm_forward.1} parent=0 // pred_check
    _
  $region19: #{lstm_forward.1} parent=0 // pred_check_branch
    %23 = sbr.rel (0) target = $region21
  $region20: #{lstm_forward.1} parent=0 // pred_region
    _
  $region21: #{lstm_forward.1} parent=0 // pred_fallthru
    _
  // Predicated region
  $region22: #{lstm_forward.1} parent=0 // pred_check
    _
  $region23: #{lstm_forward.1} parent=0 // pred_check_branch
    %25 = sbr.rel (0) target = $region25
  $region24: #{lstm_forward.1} parent=0 // pred_region
    _
  $region25: #{lstm_forward.1} parent=0 // pred_fallthru
    _
  %p27 = scmp.eq.s32.totalorder 0, 0
  // Predicated region
  $region26: #{lstm_forward.1} parent=0 // pred_check
    %p28 = pneg %p27
  $region27: #{lstm_forward.1} parent=0 // pred_check_branch
    %30 = sbr.rel (%p28) target = $region29
  $region28: #{lstm_forward.1} parent=0 // pred_region
    %31 = vst [vmem:[%s7] sm:$0xff] 0.0
    %32 = vst [vmem:[%s8] sm:$0xff] 0.0
  $region29: #{lstm_forward.1} parent=0 // pred_fallthru
    _
  %v33 = vld [vmem:[%s0] sm:$0xf]
  %v34 = vld [vmem:[%s0 + $0x4] sm:$0xf]
  %v35 = vld [vmem:[%s0 + $0x8] sm:$0xf]
  %v36 = vld [vmem:[%s0 + $0xc] sm:$0xf]
  %v37 = vld [vmem:[%s0 + $0x10] sm:$0xf]
  %v38 = vld [vmem:[%s0 + $0x14] sm:$0xf]
  %v39 = vld [vmem:[%s0 + $0x18] sm:$0xf]
  %v40 = vld [vmem:[%s0 + $0x1c] sm:$0xf]
  %v41 = vld [vmem:[%s3] sm:$0xf]
  %v43 = vlaneseq
  %v44 = vshrl.u32 %v43, 7
  %v45 = vsub.s32 0, %v44
  %v46 = vrot.slane %v41, %v45
  %v47 = vlaneseq
  %v48 = vshrl.u32 %v47, 7
  %v49 = vsub.s32 1, %v48
  %v50 = vrot.slane %v41, %v49
  %v51 = vlaneseq
  %v52 = vshrl.u32 %v51, 7
  %v53 = vsub.s32 2, %v52
  %v54 = vrot.slane %v41, %v53
  %v55 = vlaneseq
  %v56 = vshrl.u32 %v55, 7
  %v57 = vsub.s32 3, %v56
  %v58 = vrot.slane %v41, %v57
  %v63 = vld [vmem:[%s1] sm:$0xff]
  %v64 = vld [vmem:[%s1 + $0x8] sm:$0xff]
  %v65 = vld [vmem:[%s1 + $0x10] sm:$0xff]
  %v66 = vld [vmem:[%s1 + $0x18] sm:$0xff]
  %v67 = vld [vmem:[%s1 + $0x20] sm:$0xff]
  %v68 = vld [vmem:[%s1 + $0x28] sm:$0xff]
  %v69 = vld [vmem:[%s1 + $0x30] sm:$0xff]
  %v70 = vld [vmem:[%s1 + $0x38] sm:$0xff]
  %v71 = vld [vmem:[%s1 + $0x40] sm:$0xff]
  %v72 = vld [vmem:[%s1 + $0x48] sm:$0xff]
  %v73 = vld [vmem:[%s1 + $0x50] sm:$0xff]
  %v74 = vld [vmem:[%s1 + $0x58] sm:$0xff]
  %v75 = vld [vmem:[%s1 + $0x60] sm:$0xff]
  %v76 = vld [vmem:[%s1 + $0x68] sm:$0xff]
  %v77 = vld [vmem:[%s1 + $0x70] sm:$0xff]
  %v78 = vld [vmem:[%s1 + $0x78] sm:$0xff]
  %v79 = vld [vmem:[%s1 + $0x80] sm:$0xff]
  %v80 = vld [vmem:[%s1 + $0x88] sm:$0xff]
  %v81 = vld [vmem:[%s1 + $0x90] sm:$0xff]
  %v82 = vld [vmem:[%s1 + $0x98] sm:$0xff]
  %v83 = vld [vmem:[%s1 + $0xa0] sm:$0xff]
  %v84 = vld [vmem:[%s1 + $0xa8] sm:$0xff]
  %v85 = vld [vmem:[%s1 + $0xb0] sm:$0xff]
  %v86 = vld [vmem:[%s1 + $0xb8] sm:$0xff]
  %v87 = vld [vmem:[%s1 + $0xc0] sm:$0xff]
  %v88 = vld [vmem:[%s1 + $0xc8] sm:$0xff]
  %v89 = vld [vmem:[%s1 + $0xd0] sm:$0xff]
  %v90 = vld [vmem:[%s1 + $0xd8] sm:$0xff]
  %v91 = vld [vmem:[%s1 + $0xe0] sm:$0xff]
  %v92 = vld [vmem:[%s1 + $0xe8] sm:$0xff]
  %v93 = vld [vmem:[%s1 + $0xf0] sm:$0xff]
  %v94 = vld [vmem:[%s1 + $0xf8] sm:$0xff]
  %v103 = vunpack.c.l.b16 %v33
  %v104 = vunpack.c.l.b16 %v34
  %v105 = vunpack.c.l.b16 %v35
  %v106 = vunpack.c.l.b16 %v36
  %v107 = vunpack.c.l.b16 %v37
  %v108 = vunpack.c.l.b16 %v38
  %v109 = vunpack.c.l.b16 %v39
  %v110 = vunpack.c.l.b16 %v40
  %v111 = vpack.c.b16 %v104, %v103
  %v112 = vpack.c.b16 %v106, %v105
  %v113 = vpack.c.b16 %v108, %v107
  %v114 = vpack.c.b16 %v110, %v109
  %v151 = vunpack.c.l.b16 %v63
  %v152 = vunpack.c.h.b16 %v63
  %v153 = vunpack.c.l.b16 %v64
  %v154 = vunpack.c.h.b16 %v64
  %v155 = vunpack.c.l.b16 %v65
  %v156 = vunpack.c.h.b16 %v65
  %v157 = vunpack.c.l.b16 %v66
  %v158 = vunpack.c.h.b16 %v66
  %v159 = vunpack.c.l.b16 %v67
  %v160 = vunpack.c.h.b16 %v67
  %v161 = vunpack.c.l.b16 %v68
  %v162 = vunpack.c.h.b16 %v68
  %v163 = vunpack.c.l.b16 %v69
  %v164 = vunpack.c.h.b16 %v69
  %v165 = vunpack.c.l.b16 %v70
  %v166 = vunpack.c.h.b16 %v70
  %v167 = vunpack.c.l.b16 %v71
  %v168 = vunpack.c.h.b16 %v71
  %v169 = vunpack.c.l.b16 %v72
  %v170 = vunpack.c.h.b16 %v72
  %v171 = vunpack.c.l.b16 %v73
  %v172 = vunpack.c.h.b16 %v73
  %v173 = vunpack.c.l.b16 %v74
  %v174 = vunpack.c.h.b16 %v74
  %v175 = vunpack.c.l.b16 %v75
  %v176 = vunpack.c.h.b16 %v75
  %v177 = vunpack.c.l.b16 %v76
  %v178 = vunpack.c.h.b16 %v76
  %v179 = vunpack.c.l.b16 %v77
  %v180 = vunpack.c.h.b16 %v77
  %v181 = vunpack.c.l.b16 %v78
  %v182 = vunpack.c.h.b16 %v78
  %v183 = vunpack.c.l.b16 %v79
  %v184 = vunpack.c.h.b16 %v79
  %v185 = vunpack.c.l.b16 %v80
  %v186 = vunpack.c.h.b16 %v80
  %v187 = vunpack.c.l.b16 %v81
  %v188 = vunpack.c.h.b16 %v81
  %v189 = vunpack.c.l.b16 %v82
  %v190 = vunpack.c.h.b16 %v82
  %v191 = vunpack.c.l.b16 %v83
  %v192 = vunpack.c.h.b16 %v83
  %v193 = vunpack.c.l.b16 %v84
  %v194 = vunpack.c.h.b16 %v84
  %v195 = vunpack.c.l.b16 %v85
  %v196 = vunpack.c.h.b16 %v85
  %v197 = vunpack.c.l.b16 %v86
  %v198 = vunpack.c.h.b16 %v86
  %v199 = vunpack.c.l.b16 %v87
  %v200 = vunpack.c.h.b16 %v87
  %v201 = vunpack.c.l.b16 %v88
  %v202 = vunpack.c.h.b16 %v88
  %v203 = vunpack.c.l.b16 %v89
  %v204 = vunpack.c.h.b16 %v89
  %v205 = vunpack.c.l.b16 %v90
  %v206 = vunpack.c.h.b16 %v90
  %v207 = vunpack.c.l.b16 %v91
  %v208 = vunpack.c.h.b16 %v91
  %v209 = vunpack.c.l.b16 %v92
  %v210 = vunpack.c.h.b16 %v92
  %v211 = vunpack.c.l.b16 %v93
  %v212 = vunpack.c.h.b16 %v93
  %v213 = vunpack.c.l.b16 %v94
  %v214 = vunpack.c.h.b16 %v94
  %v215 = vpack.c.b16 %v155, %v151
  %v216 = vpack.c.b16 %v156, %v152
  %v217 = vpack.c.b16 %v157, %v153
  %v218 = vpack.c.b16 %v158, %v154
  %v219 = vpack.c.b16 %v163, %v159
  %v220 = vpack.c.b16 %v164, %v160
  %v221 = vpack.c.b16 %v165, %v161
  %v222 = vpack.c.b16 %v166, %v162
  %v223 = vpack.c.b16 %v171, %v167
  %v224 = vpack.c.b16 %v172, %v168
  %v225 = vpack.c.b16 %v173, %v169
  %v226 = vpack.c.b16 %v174, %v170
  %v227 = vpack.c.b16 %v179, %v175
  %v228 = vpack.c.b16 %v180, %v176
  %v229 = vpack.c.b16 %v181, %v177
  %v230 = vpack.c.b16 %v182, %v178
  %v231 = vpack.c.b16 %v187, %v183
  %v232 = vpack.c.b16 %v188, %v184
  %v233 = vpack.c.b16 %v189, %v185
  %v234 = vpack.c.b16 %v190, %v186
  %v235 = vpack.c.b16 %v195, %v191
  %v236 = vpack.c.b16 %v196, %v192
  %v237 = vpack.c.b16 %v197, %v193
  %v238 = vpack.c.b16 %v198, %v194
  %v239 = vpack.c.b16 %v203, %v199
  %v240 = vpack.c.b16 %v204, %v200
  %v241 = vpack.c.b16 %v205, %v201
  %v242 = vpack.c.b16 %v206, %v202
  %v243 = vpack.c.b16 %v211, %v207
  %v244 = vpack.c.b16 %v212, %v208
  %v245 = vpack.c.b16 %v213, %v209
  %v246 = vpack.c.b16 %v214, %v210
  %279 = vmatprep.subr.bf16.mxu0 %v216
  %280 = vmatpush1.bf16.msra.mxu0 %v215
  %281 = vmatprep.subr.bf16.mxu0 %v220
  %282 = vmatpush1.bf16.msra.mxu0 %v219
  %283 = vmatprep.subr.bf16.mxu0 %v224
  %284 = vmatpush1.bf16.msra.mxu0 %v223
  %285 = vmatprep.subr.bf16.mxu0 %v228
  %286 = vmatpush1.bf16.msra.mxu0 %v227
  %287 = vmatprep.subr.bf16.mxu0 %v232
  %288 = vmatpush1.bf16.msra.mxu0 %v231
  %289 = vmatprep.subr.bf16.mxu0 %v236
  %290 = vmatpush1.bf16.msra.mxu0 %v235
  %291 = vmatprep.subr.bf16.mxu0 %v240
  %292 = vmatpush1.bf16.msra.mxu0 %v239
  %293 = vmatprep.subr.bf16.mxu0 %v244
  %294 = vmatpush1.bf16.msra.mxu0 %v243
  %295 = vmatprep.subr.bf16.mxu0 0
  %296 = vmatpush1.bf16.msra.mxu0 0
  %297 = vmatprep.subr.bf16.mxu0 0
  %298 = vmatpush1.bf16.msra.mxu0 0
  %299 = vmatprep.subr.bf16.mxu0 0
  %300 = vmatpush1.bf16.msra.mxu0 0
  %301 = vmatprep.subr.bf16.mxu0 0
  %302 = vmatpush1.bf16.msra.mxu0 0
  %303 = vmatprep.subr.bf16.mxu0 0
  %304 = vmatpush1.bf16.msra.mxu0 0
  %305 = vmatprep.subr.bf16.mxu0 0
  %306 = vmatpush1.bf16.msra.mxu0 0
  %307 = vmatprep.subr.bf16.mxu0 0
  %308 = vmatpush1.bf16.msra.mxu0 0
  %309 = vmatprep.subr.bf16.mxu0 0
  %310 = vmatpush1.bf16.msra.mxu0 0
  %311 = vmatprep.mubr.bf16.mxu0 0
  %312 = vmatmul.mubr.bf16.gmra.mrb[0].mxu0 %v111
  %v313 = vpop.f32.mrb[0].mxu0
  %v314 = vadd.f32 %v46, %v313
  %v315 = vpop.f32.mrb[0].mxu0
  %v316 = vadd.f32 %v50, %v315
  %v317 = vpop.f32.mrb[0].mxu0
  %v318 = vadd.f32 %v46, %v317
  %v319 = vpop.f32.mrb[0].mxu0
  %v320 = vadd.f32 %v50, %v319
  %321 = vmatprep.mubr.bf16.mxu0 0
  %322 = vmatmul.mubr.bf16.gmra.mrb[0].mxu0 %v112
  %v323 = vpop.f32.mrb[0].mxu0
  %v324 = vadd.f32 %v46, %v323
  %v325 = vpop.f32.mrb[0].mxu0
  %v326 = vadd.f32 %v50, %v325
  %v327 = vpop.f32.mrb[0].mxu0
  %v328 = vadd.f32 %v46, %v327
  %v329 = vpop.f32.mrb[0].mxu0
  %v330 = vadd.f32 %v50, %v329
  %331 = vmatprep.mubr.bf16.mxu0 0
  %332 = vmatmul.mubr.bf16.gmra.mrb[0].mxu0 %v113
  %v333 = vpop.f32.mrb[0].mxu0
  %v334 = vadd.f32 %v46, %v333
  %v335 = vpop.f32.mrb[0].mxu0
  %v336 = vadd.f32 %v50, %v335
  %v337 = vpop.f32.mrb[0].mxu0
  %v338 = vadd.f32 %v46, %v337
  %v339 = vpop.f32.mrb[0].mxu0
  %v340 = vadd.f32 %v50, %v339
  %341 = vmatprep.mubr.bf16.mxu0 0
  %342 = vmatmul.mubr.bf16.gmra.mrb[0].mxu0 %v114
  %v343 = vpop.f32.mrb[0].mxu0
  %v344 = vadd.f32 %v46, %v343
  %v345 = vpop.f32.mrb[0].mxu0
  %v346 = vadd.f32 %v50, %v345
  %v347 = vpop.f32.mrb[0].mxu0
  %v348 = vadd.f32 %v46, %v347
  %v349 = vpop.f32.mrb[0].mxu0
  %v350 = vadd.f32 %v50, %v349
  %351 = vdwg.mxu0
  %352 = vmatprep.subr.bf16.mxu0 %v218
  %353 = vmatpush1.bf16.msra.mxu0 %v217
  %354 = vmatprep.subr.bf16.mxu0 %v222
  %355 = vmatpush1.bf16.msra.mxu0 %v221
  %356 = vmatprep.subr.bf16.mxu0 %v226
  %357 = vmatpush1.bf16.msra.mxu0 %v225
  %358 = vmatprep.subr.bf16.mxu0 %v230
  %359 = vmatpush1.bf16.msra.mxu0 %v229
  %360 = vmatprep.subr.bf16.mxu0 %v234
  %361 = vmatpush1.bf16.msra.mxu0 %v233
  %362 = vmatprep.subr.bf16.mxu0 %v238
  %363 = vmatpush1.bf16.msra.mxu0 %v237
  %364 = vmatprep.subr.bf16.mxu0 %v242
  %365 = vmatpush1.bf16.msra.mxu0 %v241
  %366 = vmatprep.subr.bf16.mxu0 %v246
  %367 = vmatpush1.bf16.msra.mxu0 %v245
  %368 = vmatprep.subr.bf16.mxu0 0
  %369 = vmatpush1.bf16.msra.mxu0 0
  %370 = vmatprep.subr.bf16.mxu0 0
  %371 = vmatpush1.bf16.msra.mxu0 0
  %372 = vmatprep.subr.bf16.mxu0 0
  %373 = vmatpush1.bf16.msra.mxu0 0
  %374 = vmatprep.subr.bf16.mxu0 0
  %375 = vmatpush1.bf16.msra.mxu0 0
  %376 = vmatprep.subr.bf16.mxu0 0
  %377 = vmatpush1.bf16.msra.mxu0 0
  %378 = vmatprep.subr.bf16.mxu0 0
  %379 = vmatpush1.bf16.msra.mxu0 0
  %380 = vmatprep.subr.bf16.mxu0 0
  %381 = vmatpush1.bf16.msra.mxu0 0
  %382 = vmatprep.subr.bf16.mxu0 0
  %383 = vmatpush1.bf16.msra.mxu0 0
  %384 = vmatprep.mubr.bf16.mxu0 0
  %385 = vmatmul.mubr.bf16.gmra.mrb[0].mxu0 %v111
  %v386 = vpop.f32.mrb[0].mxu0
  %v387 = vadd.f32 %v54, %v386
  %v388 = vpop.f32.mrb[0].mxu0
  %v389 = vadd.f32 %v58, %v388
  %v390 = vpop.f32.mrb[0].mxu0
  %v391 = vadd.f32 %v54, %v390
  %v392 = vpop.f32.mrb[0].mxu0
  %v393 = vadd.f32 %v58, %v392
  %394 = vmatprep.mubr.bf16.mxu0 0
  %395 = vmatmul.mubr.bf16.gmra.mrb[0].mxu0 %v112
  %v396 = vpop.f32.mrb[0].mxu0
  %v397 = vadd.f32 %v54, %v396
  %v398 = vpop.f32.mrb[0].mxu0
  %v399 = vadd.f32 %v58, %v398
  %v400 = vpop.f32.mrb[0].mxu0
  %v401 = vadd.f32 %v54, %v400
  %v402 = vpop.f32.mrb[0].mxu0
  %v403 = vadd.f32 %v58, %v402
  %404 = vmatprep.mubr.bf16.mxu0 0
  %405 = vmatmul.mubr.bf16.gmra.mrb[0].mxu0 %v113
  %v406 = vpop.f32.mrb[0].mxu0
  %v407 = vadd.f32 %v54, %v406
  %v408 = vpop.f32.mrb[0].mxu0
  %v409 = vadd.f32 %v58, %v408
  %v410 = vpop.f32.mrb[0].mxu0
  %v411 = vadd.f32 %v54, %v410
  %v412 = vpop.f32.mrb[0].mxu0
  %v413 = vadd.f32 %v58, %v412
  %414 = vmatprep.mubr.bf16.mxu0 0
  %415 = vmatmul.mubr.bf16.gmra.mrb[0].mxu0 %v114
  %v416 = vpop.f32.mrb[0].mxu0
  %v417 = vadd.f32 %v54, %v416
  %v418 = vpop.f32.mrb[0].mxu0
  %v419 = vadd.f32 %v58, %v418
  %v420 = vpop.f32.mrb[0].mxu0
  %v421 = vadd.f32 %v54, %v420
  %v422 = vpop.f32.mrb[0].mxu0
  %v423 = vadd.f32 %v58, %v422
  %424 = vdwg.mxu0
  %425 = vst [vmem:[#allocation2] sm:$0xff] %v314
  %426 = vst [vmem:[#allocation2 + $0x8] sm:$0xff] %v316
  %427 = vst [vmem:[#allocation2 + $0x10] sm:$0xff] %v387
  %428 = vst [vmem:[#allocation2 + $0x18] sm:$0xff] %v389
  %429 = vst [vmem:[#allocation2 + $0x20] sm:$0xff] %v318
  %430 = vst [vmem:[#allocation2 + $0x28] sm:$0xff] %v320
  %431 = vst [vmem:[#allocation2 + $0x30] sm:$0xff] %v391
  %432 = vst [vmem:[#allocation2 + $0x38] sm:$0xff] %v393
  %433 = vst [vmem:[#allocation2 + $0x40] sm:$0xff] %v324
  %434 = vst [vmem:[#allocation2 + $0x48] sm:$0xff] %v326
  %435 = vst [vmem:[#allocation2 + $0x50] sm:$0xff] %v397
  %436 = vst [vmem:[#allocation2 + $0x58] sm:$0xff] %v399
  %437 = vst [vmem:[#allocation2 + $0x60] sm:$0xff] %v328
  %438 = vst [vmem:[#allocation2 + $0x68] sm:$0xff] %v330
  %439 = vst [vmem:[#allocation2 + $0x70] sm:$0xff] %v401
  %440 = vst [vmem:[#allocation2 + $0x78] sm:$0xff] %v403
  %441 = vst [vmem:[#allocation2 + $0x80] sm:$0xff] %v334
  %442 = vst [vmem:[#allocation2 + $0x88] sm:$0xff] %v336
  %443 = vst [vmem:[#allocation2 + $0x90] sm:$0xff] %v407
  %444 = vst [vmem:[#allocation2 + $0x98] sm:$0xff] %v409
  %445 = vst [vmem:[#allocation2 + $0xa0] sm:$0xff] %v338
  %446 = vst [vmem:[#allocation2 + $0xa8] sm:$0xff] %v340
  %447 = vst [vmem:[#allocation2 + $0xb0] sm:$0xff] %v411
  %448 = vst [vmem:[#allocation2 + $0xb8] sm:$0xff] %v413
  %449 = vst [vmem:[#allocation2 + $0xc0] sm:$0xff] %v344
  %450 = vst [vmem:[#allocation2 + $0xc8] sm:$0xff] %v346
  %451 = vst [vmem:[#allocation2 + $0xd0] sm:$0xff] %v417
  %452 = vst [vmem:[#allocation2 + $0xd8] sm:$0xff] %v419
  %453 = vst [vmem:[#allocation2 + $0xe0] sm:$0xff] %v348
  %454 = vst [vmem:[#allocation2 + $0xe8] sm:$0xff] %v350
  %455 = vst [vmem:[#allocation2 + $0xf0] sm:$0xff] %v421
  %456 = vst [vmem:[#allocation2 + $0xf8] sm:$0xff] %v423
  %v457 = vld [vmem:[%s2] sm:$0xff]
  %v458 = vld [vmem:[%s2 + $0x8] sm:$0xff]
  %v459 = vld [vmem:[%s2 + $0x10] sm:$0xff]
  %v460 = vld [vmem:[%s2 + $0x18] sm:$0xff]
  %v461 = vld [vmem:[%s2 + $0x20] sm:$0xff]
  %v462 = vld [vmem:[%s2 + $0x28] sm:$0xff]
  %v463 = vld [vmem:[%s2 + $0x30] sm:$0xff]
  %v464 = vld [vmem:[%s2 + $0x38] sm:$0xff]
  %v465 = vld [vmem:[%s2 + $0x40] sm:$0xff]
  %v466 = vld [vmem:[%s2 + $0x48] sm:$0xff]
  %v467 = vld [vmem:[%s2 + $0x50] sm:$0xff]
  %v468 = vld [vmem:[%s2 + $0x58] sm:$0xff]
  %v469 = vld [vmem:[%s2 + $0x60] sm:$0xff]
  %v470 = vld [vmem:[%s2 + $0x68] sm:$0xff]
  %v471 = vld [vmem:[%s2 + $0x70] sm:$0xff]
  %v472 = vld [vmem:[%s2 + $0x78] sm:$0xff]
  %v473 = vld [vmem:[%s2 + $0x80] sm:$0xff]
  %v474 = vld [vmem:[%s2 + $0x88] sm:$0xff]
  %v475 = vld [vmem:[%s2 + $0x90] sm:$0xff]
  %v476 = vld [vmem:[%s2 + $0x98] sm:$0xff]
  %v477 = vld [vmem:[%s2 + $0xa0] sm:$0xff]
  %v478 = vld [vmem:[%s2 + $0xa8] sm:$0xff]
  %v479 = vld [vmem:[%s2 + $0xb0] sm:$0xff]
  %v480 = vld [vmem:[%s2 + $0xb8] sm:$0xff]
  %v481 = vld [vmem:[%s2 + $0xc0] sm:$0xff]
  %v482 = vld [vmem:[%s2 + $0xc8] sm:$0xff]
  %v483 = vld [vmem:[%s2 + $0xd0] sm:$0xff]
  %v484 = vld [vmem:[%s2 + $0xd8] sm:$0xff]
  %v485 = vld [vmem:[%s2 + $0xe0] sm:$0xff]
  %v486 = vld [vmem:[%s2 + $0xe8] sm:$0xff]
  %v487 = vld [vmem:[%s2 + $0xf0] sm:$0xff]
  %v488 = vld [vmem:[%s2 + $0xf8] sm:$0xff]
  %v489 = vld [vmem:[%s7] sm:$0xff]
  %v490 = vld [vmem:[%s8] sm:$0xff]
  %v491 = vld [vmem:[#allocation2] sm:$0xff]
  %v492 = vld [vmem:[#allocation2 + $0x8] sm:$0xff]
  %v493 = vld [vmem:[#allocation2 + $0x10] sm:$0xff]
  %v494 = vld [vmem:[#allocation2 + $0x18] sm:$0xff]
  %v495 = vpack.c.bf16 %v489, %v489
  %v528 = vunpack.c.l.b16 %v457
  %v529 = vunpack.c.h.b16 %v457
  %v530 = vunpack.c.l.b16 %v458
  %v531 = vunpack.c.h.b16 %v458
  %v532 = vunpack.c.l.b16 %v459
  %v533 = vunpack.c.h.b16 %v459
  %v534 = vunpack.c.l.b16 %v460
  %v535 = vunpack.c.h.b16 %v460
  %v536 = vunpack.c.l.b16 %v461
  %v537 = vunpack.c.h.b16 %v461
  %v538 = vunpack.c.l.b16 %v462
  %v539 = vunpack.c.h.b16 %v462
  %v540 = vunpack.c.l.b16 %v463
  %v541 = vunpack.c.h.b16 %v463
  %v542 = vunpack.c.l.b16 %v464
  %v543 = vunpack.c.h.b16 %v464
  %v544 = vunpack.c.l.b16 %v465
  %v545 = vunpack.c.h.b16 %v465
  %v546 = vunpack.c.l.b16 %v466
  %v547 = vunpack.c.h.b16 %v466
  %v548 = vunpack.c.l.b16 %v467
  %v549 = vunpack.c.h.b16 %v467
  %v550 = vunpack.c.l.b16 %v468
  %v551 = vunpack.c.h.b16 %v468
  %v552 = vunpack.c.l.b16 %v469
  %v553 = vunpack.c.h.b16 %v469
  %v554 = vunpack.c.l.b16 %v470
  %v555 = vunpack.c.h.b16 %v470
  %v556 = vunpack.c.l.b16 %v471
  %v557 = vunpack.c.h.b16 %v471
  %v558 = vunpack.c.l.b16 %v472
  %v559 = vunpack.c.h.b16 %v472
  %v560 = vunpack.c.l.b16 %v473
  %v561 = vunpack.c.h.b16 %v473
  %v562 = vunpack.c.l.b16 %v474
  %v563 = vunpack.c.h.b16 %v474
  %v564 = vunpack.c.l.b16 %v475
  %v565 = vunpack.c.h.b16 %v475
  %v566 = vunpack.c.l.b16 %v476
  %v567 = vunpack.c.h.b16 %v476
  %v568 = vunpack.c.l.b16 %v477
  %v569 = vunpack.c.h.b16 %v477
  %v570 = vunpack.c.l.b16 %v478
  %v571 = vunpack.c.h.b16 %v478
  %v572 = vunpack.c.l.b16 %v479
  %v573 = vunpack.c.h.b16 %v479
  %v574 = vunpack.c.l.b16 %v480
  %v575 = vunpack.c.h.b16 %v480
  %v576 = vunpack.c.l.b16 %v481
  %v577 = vunpack.c.h.b16 %v481
  %v578 = vunpack.c.l.b16 %v482
  %v579 = vunpack.c.h.b16 %v482
  %v580 = vunpack.c.l.b16 %v483
  %v581 = vunpack.c.h.b16 %v483
  %v582 = vunpack.c.l.b16 %v484
  %v583 = vunpack.c.h.b16 %v484
  %v584 = vunpack.c.l.b16 %v485
  %v585 = vunpack.c.h.b16 %v485
  %v586 = vunpack.c.l.b16 %v486
  %v587 = vunpack.c.h.b16 %v486
  %v588 = vunpack.c.l.b16 %v487
  %v589 = vunpack.c.h.b16 %v487
  %v590 = vunpack.c.l.b16 %v488
  %v591 = vunpack.c.h.b16 %v488
  %v592 = vpack.c.b16 %v532, %v528
  %v593 = vpack.c.b16 %v533, %v529
  %v594 = vpack.c.b16 %v534, %v530
  %v595 = vpack.c.b16 %v535, %v531
  %v596 = vpack.c.b16 %v540, %v536
  %v597 = vpack.c.b16 %v541, %v537
  %v598 = vpack.c.b16 %v542, %v538
  %v599 = vpack.c.b16 %v543, %v539
  %v600 = vpack.c.b16 %v548, %v544
  %v601 = vpack.c.b16 %v549, %v545
  %v602 = vpack.c.b16 %v550, %v546
  %v603 = vpack.c.b16 %v551, %v547
  %v604 = vpack.c.b16 %v556, %v552
  %v605 = vpack.c.b16 %v557, %v553
  %v606 = vpack.c.b16 %v558, %v554
  %v607 = vpack.c.b16 %v559, %v555
  %v608 = vpack.c.b16 %v564, %v560
  %v609 = vpack.c.b16 %v565, %v561
  %v610 = vpack.c.b16 %v566, %v562
  %v611 = vpack.c.b16 %v567, %v563
  %v612 = vpack.c.b16 %v572, %v568
  %v613 = vpack.c.b16 %v573, %v569
  %v614 = vpack.c.b16 %v574, %v570
  %v615 = vpack.c.b16 %v575, %v571
  %v616 = vpack.c.b16 %v580, %v576
  %v617 = vpack.c.b16 %v581, %v577
  %v618 = vpack.c.b16 %v582, %v578
  %v619 = vpack.c.b16 %v583, %v579
  %v620 = vpack.c.b16 %v588, %v584
  %v621 = vpack.c.b16 %v589, %v585
  %v622 = vpack.c.b16 %v590, %v586
  %v623 = vpack.c.b16 %v591, %v587
  %656 = vmatprep.subr.bf16.mxu0 %v593
  %657 = vmatpush1.bf16.msra.mxu0 %v592
  %658 = vmatprep.subr.bf16.mxu0 %v597
  %659 = vmatpush1.bf16.msra.mxu0 %v596
  %660 = vmatprep.subr.bf16.mxu0 %v601
  %661 = vmatpush1.bf16.msra.mxu0 %v600
  %662 = vmatprep.subr.bf16.mxu0 %v605
  %663 = vmatpush1.bf16.msra.mxu0 %v604
  %664 = vmatprep.subr.bf16.mxu0 %v609
  %665 = vmatpush1.bf16.msra.mxu0 %v608
  %666 = vmatprep.subr.bf16.mxu0 %v613
  %667 = vmatpush1.bf16.msra.mxu0 %v612
  %668 = vmatprep.subr.bf16.mxu0 %v617
  %669 = vmatpush1.bf16.msra.mxu0 %v616
  %670 = vmatprep.subr.bf16.mxu0 %v621
  %671 = vmatpush1.bf16.msra.mxu0 %v620
  %672 = vmatprep.subr.bf16.mxu0 0
  %673 = vmatpush1.bf16.msra.mxu0 0
  %674 = vmatprep.subr.bf16.mxu0 0
  %675 = vmatpush1.bf16.msra.mxu0 0
  %676 = vmatprep.subr.bf16.mxu0 0
  %677 = vmatpush1.bf16.msra.mxu0 0
  %678 = vmatprep.subr.bf16.mxu0 0
  %679 = vmatpush1.bf16.msra.mxu0 0
  %680 = vmatprep.subr.bf16.mxu0 0
  %681 = vmatpush1.bf16.msra.mxu0 0
  %682 = vmatprep.subr.bf16.mxu0 0
  %683 = vmatpush1.bf16.msra.mxu0 0
  %684 = vmatprep.subr.bf16.mxu0 0
  %685 = vmatpush1.bf16.msra.mxu0 0
  %686 = vmatprep.subr.bf16.mxu0 0
  %687 = vmatpush1.bf16.msra.mxu0 0
  %688 = vmatprep.mubr.bf16.mxu0 0
  %689 = vmatmul.mubr.bf16.gmra.mrb[0].mxu0 %v495
  %v690 = vpop.f32.mrb[0].mxu0
  %v691 = vadd.f32 0.0, %v690
  %v692 = vpop.f32.mrb[0].mxu0
  %v693 = vadd.f32 0.0, %v692
  %v694 = vpop.f32.mrb[0].mxu0
  %v695 = vpop.f32.mrb[0].mxu0
  %696 = vdwg.mxu0
  %697 = vmatprep.subr.bf16.mxu0 %v595
  %698 = vmatpush1.bf16.msra.mxu0 %v594
  %699 = vmatprep.subr.bf16.mxu0 %v599
  %700 = vmatpush1.bf16.msra.mxu0 %v598
  %701 = vmatprep.subr.bf16.mxu0 %v603
  %702 = vmatpush1.bf16.msra.mxu0 %v602
  %703 = vmatprep.subr.bf16.mxu0 %v607
  %704 = vmatpush1.bf16.msra.mxu0 %v606
  %705 = vmatprep.subr.bf16.mxu0 %v611
  %706 = vmatpush1.bf16.msra.mxu0 %v610
  %707 = vmatprep.subr.bf16.mxu0 %v615
  %708 = vmatpush1.bf16.msra.mxu0 %v614
  %709 = vmatprep.subr.bf16.mxu0 %v619
  %710 = vmatpush1.bf16.msra.mxu0 %v618
  %711 = vmatprep.subr.bf16.mxu0 %v623
  %712 = vmatpush1.bf16.msra.mxu0 %v622
  %713 = vmatprep.subr.bf16.mxu0 0
  %714 = vmatpush1.bf16.msra.mxu0 0
  %715 = vmatprep.subr.bf16.mxu0 0
  %716 = vmatpush1.bf16.msra.mxu0 0
  %717 = vmatprep.subr.bf16.mxu0 0
  %718 = vmatpush1.bf16.msra.mxu0 0
  %719 = vmatprep.subr.bf16.mxu0 0
  %720 = vmatpush1.bf16.msra.mxu0 0
  %721 = vmatprep.subr.bf16.mxu0 0
  %722 = vmatpush1.bf16.msra.mxu0 0
  %723 = vmatprep.subr.bf16.mxu0 0
  %724 = vmatpush1.bf16.msra.mxu0 0
  %725 = vmatprep.subr.bf16.mxu0 0
  %726 = vmatpush1.bf16.msra.mxu0 0
  %727 = vmatprep.subr.bf16.mxu0 0
  %728 = vmatpush1.bf16.msra.mxu0 0
  %729 = vmatprep.mubr.bf16.mxu0 0
  %730 = vmatmul.mubr.bf16.gmra.mrb[0].mxu0 %v495
  %v731 = vpop.f32.mrb[0].mxu0
  %v732 = vadd.f32 0.0, %v731
  %v733 = vpop.f32.mrb[0].mxu0
  %v734 = vadd.f32 0.0, %v733
  %v735 = vpop.f32.mrb[0].mxu0
  %v736 = vpop.f32.mrb[0].mxu0
  %737 = vdwg.mxu0
  %v738 = vadd.f32 %v491, %v691
  %v739 = vadd.f32 %v492, %v693
  %v740 = vadd.f32 %v493, %v732
  %v741 = vadd.f32 %v494, %v734
  %v742 = vxor.u32 %v738, 2147483648
  %v743 = vmul.f32 %v742, 1.442695
  %v744 = vpow.pop %v743
  %v745 = vadd.f32 %v744, 1.0
  %v746 = vrcp.pop %v745
  %v747 = vmul.f32 1.0, %v746
  %v748 = vxor.u32 %v739, 2147483648
  %v749 = vmul.f32 %v748, 1.442695
  %v750 = vpow.pop %v749
  %v751 = vadd.f32 %v750, 1.0
  %v752 = vrcp.pop %v751
  %v753 = vmul.f32 1.0, %v752
  %v754 = vtanh.pop %v740
  %v755 = vxor.u32 %v741, 2147483648
  %v756 = vmul.f32 %v755, 1.442695
  %v757 = vpow.pop %v756
  %v758 = vadd.f32 %v757, 1.0
  %v759 = vrcp.pop %v758
  %v760 = vmul.f32 1.0, %v759
  %v761 = vmul.f32 %v753, %v490
  %v762 = vmul.f32 %v747, %v754
  %v763 = vadd.f32 %v761, %v762
  %v764 = vtanh.pop %v763
  %v765 = vmul.f32 %v760, %v764
  %v766 = vpack.c.bf16 %v765, %v765
  %767 = vst [vmem:[#allocation3] sm:$0xf] %v766
  %s768 = scalar_lea.vmem [#allocation2], 32
  %v769 = vld [vmem:[%s768] sm:$0xff]
  %v770 = vld [vmem:[%s768 + $0x8] sm:$0xff]
  %v771 = vld [vmem:[%s768 + $0x10] sm:$0xff]
  %v772 = vld [vmem:[%s768 + $0x18] sm:$0xff]
  %773 = vmatprep.subr.bf16.mxu0 %v593
  %774 = vmatpush1.bf16.msra.mxu0 %v592
  %775 = vmatprep.subr.bf16.mxu0 %v597
  %776 = vmatpush1.bf16.msra.mxu0 %v596
  %777 = vmatprep.subr.bf16.mxu0 %v601
  %778 = vmatpush1.bf16.msra.mxu0 %v600
  %779 = vmatprep.subr.bf16.mxu0 %v605
  %780 = vmatpush1.bf16.msra.mxu0 %v604
  %781 = vmatprep.subr.bf16.mxu0 %v609
  %782 = vmatpush1.bf16.msra.mxu0 %v608
  %783 = vmatprep.subr.bf16.mxu0 %v613
  %784 = vmatpush1.bf16.msra.mxu0 %v612
  %785 = vmatprep.subr.bf16.mxu0 %v617
  %786 = vmatpush1.bf16.msra.mxu0 %v616
  %787 = vmatprep.subr.bf16.mxu0 %v621
  %788 = vmatpush1.bf16.msra.mxu0 %v620
  %789 = vmatprep.subr.bf16.mxu0 0
  %790 = vmatpush1.bf16.msra.mxu0 0
  %791 = vmatprep.subr.bf16.mxu0 0
  %792 = vmatpush1.bf16.msra.mxu0 0
  %793 = vmatprep.subr.bf16.mxu0 0
  %794 = vmatpush1.bf16.msra.mxu0 0
  %795 = vmatprep.subr.bf16.mxu0 0
  %796 = vmatpush1.bf16.msra.mxu0 0
  %797 = vmatprep.subr.bf16.mxu0 0
  %798 = vmatpush1.bf16.msra.mxu0 0
  %799 = vmatprep.subr.bf16.mxu0 0
  %800 = vmatpush1.bf16.msra.mxu0 0
  %801 = vmatprep.subr.bf16.mxu0 0
  %802 = vmatpush1.bf16.msra.mxu0 0
  %803 = vmatprep.subr.bf16.mxu0 0
  %804 = vmatpush1.bf16.msra.mxu0 0
  %805 = vmatprep.mubr.bf16.mxu0 0
  %806 = vmatmul.mubr.bf16.gmra.mrb[0].mxu0 %v766
  %v807 = vpop.f32.mrb[0].mxu0
  %v808 = vadd.f32 0.0, %v807
  %v809 = vpop.f32.mrb[0].mxu0
  %v810 = vadd.f32 0.0, %v809
  %v811 = vpop.f32.mrb[0].mxu0
  %v812 = vpop.f32.mrb[0].mxu0
  %813 = vdwg.mxu0
  %814 = vmatprep.subr.bf16.mxu0 %v595
  %815 = vmatpush1.bf16.msra.mxu0 %v594
  %816 = vmatprep.subr.bf16.mxu0 %v599
  %817 = vmatpush1.bf16.msra.mxu0 %v598
  %818 = vmatprep.subr.bf16.mxu0 %v603
  %819 = vmatpush1.bf16.msra.mxu0 %v602
  %820 = vmatprep.subr.bf16.mxu0 %v607
  %821 = vmatpush1.bf16.msra.mxu0 %v606
  %822 = vmatprep.subr.bf16.mxu0 %v611
  %823 = vmatpush1.bf16.msra.mxu0 %v610
  %824 = vmatprep.subr.bf16.mxu0 %v615
  %825 = vmatpush1.bf16.msra.mxu0 %v614
  %826 = vmatprep.subr.bf16.mxu0 %v619
  %827 = vmatpush1.bf16.msra.mxu0 %v618
  %828 = vmatprep.subr.bf16.mxu0 %v623
  %829 = vmatpush1.bf16.msra.mxu0 %v622
  %830 = vmatprep.subr.bf16.mxu0 0
  %831 = vmatpush1.bf16.msra.mxu0 0
  %832 = vmatprep.subr.bf16.mxu0 0
  %833 = vmatpush1.bf16.msra.mxu0 0
  %834 = vmatprep.subr.bf16.mxu0 0
  %835 = vmatpush1.bf16.msra.mxu0 0
  %836 = vmatprep.subr.bf16.mxu0 0
  %837 = vmatpush1.bf16.msra.mxu0 0
  %838 = vmatprep.subr.bf16.mxu0 0
  %839 = vmatpush1.bf16.msra.mxu0 0
  %840 = vmatprep.subr.bf16.mxu0 0
  %841 = vmatpush1.bf16.msra.mxu0 0
  %842 = vmatprep.subr.bf16.mxu0 0
  %843 = vmatpush1.bf16.msra.mxu0 0
  %844 = vmatprep.subr.bf16.mxu0 0
  %845 = vmatpush1.bf16.msra.mxu0 0
  %846 = vmatprep.mubr.bf16.mxu0 0
  %847 = vmatmul.mubr.bf16.gmra.mrb[0].mxu0 %v766
  %v848 = vpop.f32.mrb[0].mxu0
  %v849 = vadd.f32 0.0, %v848
  %v850 = vpop.f32.mrb[0].mxu0
  %v851 = vadd.f32 0.0, %v850
  %v852 = vpop.f32.mrb[0].mxu0
  %v853 = vpop.f32.mrb[0].mxu0
  %854 = vdwg.mxu0
  %v855 = vadd.f32 %v769, %v808
  %v856 = vadd.f32 %v770, %v810
  %v857 = vadd.f32 %v771, %v849
  %v858 = vadd.f32 %v772, %v851
  %v859 = vxor.u32 %v855, 2147483648
  %v860 = vmul.f32 %v859, 1.442695
  %v861 = vpow.pop %v860
  %v862 = vadd.f32 %v861, 1.0
  %v863 = vrcp.pop %v862
  %v864 = vmul.f32 1.0, %v863
  %v865 = vxor.u32 %v856, 2147483648
  %v866 = vmul.f32 %v865, 1.442695
  %v867 = vpow.pop %v866
  %v868 = vadd.f32 %v867, 1.0
  %v869 = vrcp.pop %v868
  %v870 = vmul.f32 1.0, %v869
  %v871 = vtanh.pop %v857
  %v872 = vxor.u32 %v858, 2147483648
  %v873 = vmul.f32 %v872, 1.442695
  %v874 = vpow.pop %v873
  %v875 = vadd.f32 %v874, 1.0
  %v876 = vrcp.pop %v875
  %v877 = vmul.f32 1.0, %v876
  %v878 = vmul.f32 %v870, %v763
  %v879 = vmul.f32 %v864, %v871
  %v880 = vadd.f32 %v878, %v879
  %v881 = vtanh.pop %v880
  %v882 = vmul.f32 %v877, %v881
  %v883 = vpack.c.bf16 %v882, %v882
  %s884 = scalar_lea.vmem [#allocation3], 4
  %885 = vst [vmem:[%s884] sm:$0xf] %v883
  %s886 = scalar_lea.vmem [#allocation2], 64
  %v887 = vld [vmem:[%s886] sm:$0xff]
  %v888 = vld [vmem:[%s886 + $0x8] sm:$0xff]
  %v889 = vld [vmem:[%s886 + $0x10] sm:$0xff]
  %v890 = vld [vmem:[%s886 + $0x18] sm:$0xff]
  %891 = vmatprep.subr.bf16.mxu0 %v593
  %892 = vmatpush1.bf16.msra.mxu0 %v592
  %893 = vmatprep.subr.bf16.mxu0 %v597
  %894 = vmatpush1.bf16.msra.mxu0 %v596
  %895 = vmatprep.subr.bf16.mxu0 %v601
  %896 = vmatpush1.bf16.msra.mxu0 %v600
  %897 = vmatprep.subr.bf16.mxu0 %v605
  %898 = vmatpush1.bf16.msra.mxu0 %v604
  %899 = vmatprep.subr.bf16.mxu0 %v609
  %900 = vmatpush1.bf16.msra.mxu0 %v608
  %901 = vmatprep.subr.bf16.mxu0 %v613
  %902 = vmatpush1.bf16.msra.mxu0 %v612
  %903 = vmatprep.subr.bf16.mxu0 %v617
  %904 = vmatpush1.bf16.msra.mxu0 %v616
  %905 = vmatprep.subr.bf16.mxu0 %v621
  %906 = vmatpush1.bf16.msra.mxu0 %v620
  %907 = vmatprep.subr.bf16.mxu0 0
  %908 = vmatpush1.bf16.msra.mxu0 0
  %909 = vmatprep.subr.bf16.mxu0 0
  %910 = vmatpush1.bf16.msra.mxu0 0
  %911 = vmatprep.subr.bf16.mxu0 0
  %912 = vmatpush1.bf16.msra.mxu0 0
  %913 = vmatprep.subr.bf16.mxu0 0
  %914 = vmatpush1.bf16.msra.mxu0 0
  %915 = vmatprep.subr.bf16.mxu0 0
  %916 = vmatpush1.bf16.msra.mxu0 0
  %917 = vmatprep.subr.bf16.mxu0 0
  %918 = vmatpush1.bf16.msra.mxu0 0
  %919 = vmatprep.subr.bf16.mxu0 0
  %920 = vmatpush1.bf16.msra.mxu0 0
  %921 = vmatprep.subr.bf16.mxu0 0
  %922 = vmatpush1.bf16.msra.mxu0 0
  %923 = vmatprep.mubr.bf16.mxu0 0
  %924 = vmatmul.mubr.bf16.gmra.mrb[0].mxu0 %v883
  %v925 = vpop.f32.mrb[0].mxu0
  %v926 = vadd.f32 0.0, %v925
  %v927 = vpop.f32.mrb[0].mxu0
  %v928 = vadd.f32 0.0, %v927
  %v929 = vpop.f32.mrb[0].mxu0
  %v930 = vpop.f32.mrb[0].mxu0
  %931 = vdwg.mxu0
  %932 = vmatprep.subr.bf16.mxu0 %v595
  %933 = vmatpush1.bf16.msra.mxu0 %v594
  %934 = vmatprep.subr.bf16.mxu0 %v599
  %935 = vmatpush1.bf16.msra.mxu0 %v598
  %936 = vmatprep.subr.bf16.mxu0 %v603
  %937 = vmatpush1.bf16.msra.mxu0 %v602
  %938 = vmatprep.subr.bf16.mxu0 %v607
  %939 = vmatpush1.bf16.msra.mxu0 %v606
  %940 = vmatprep.subr.bf16.mxu0 %v611
  %941 = vmatpush1.bf16.msra.mxu0 %v610
  %942 = vmatprep.subr.bf16.mxu0 %v615
  %943 = vmatpush1.bf16.msra.mxu0 %v614
  %944 = vmatprep.subr.bf16.mxu0 %v619
  %945 = vmatpush1.bf16.msra.mxu0 %v618
  %946 = vmatprep.subr.bf16.mxu0 %v623
  %947 = vmatpush1.bf16.msra.mxu0 %v622
  %948 = vmatprep.subr.bf16.mxu0 0
  %949 = vmatpush1.bf16.msra.mxu0 0
  %950 = vmatprep.subr.bf16.mxu0 0
  %951 = vmatpush1.bf16.msra.mxu0 0
  %952 = vmatprep.subr.bf16.mxu0 0
  %953 = vmatpush1.bf16.msra.mxu0 0
  %954 = vmatprep.subr.bf16.mxu0 0
  %955 = vmatpush1.bf16.msra.mxu0 0
  %956 = vmatprep.subr.bf16.mxu0 0
  %957 = vmatpush1.bf16.msra.mxu0 0
  %958 = vmatprep.subr.bf16.mxu0 0
  %959 = vmatpush1.bf16.msra.mxu0 0
  %960 = vmatprep.subr.bf16.mxu0 0
  %961 = vmatpush1.bf16.msra.mxu0 0
  %962 = vmatprep.subr.bf16.mxu0 0
  %963 = vmatpush1.bf16.msra.mxu0 0
  %964 = vmatprep.mubr.bf16.mxu0 0
  %965 = vmatmul.mubr.bf16.gmra.mrb[0].mxu0 %v883
  %v966 = vpop.f32.mrb[0].mxu0
  %v967 = vadd.f32 0.0, %v966
  %v968 = vpop.f32.mrb[0].mxu0
  %v969 = vadd.f32 0.0, %v968
  %v970 = vpop.f32.mrb[0].mxu0
  %v971 = vpop.f32.mrb[0].mxu0
  %972 = vdwg.mxu0
  %v973 = vadd.f32 %v887, %v926
  %v974 = vadd.f32 %v888, %v928
  %v975 = vadd.f32 %v889, %v967
  %v976 = vadd.f32 %v890, %v969
  %v977 = vxor.u32 %v973, 2147483648
  %v978 = vmul.f32 %v977, 1.442695
  %v979 = vpow.pop %v978
  %v980 = vadd.f32 %v979, 1.0
  %v981 = vrcp.pop %v980
  %v982 = vmul.f32 1.0, %v981
  %v983 = vxor.u32 %v974, 2147483648
  %v984 = vmul.f32 %v983, 1.442695
  %v985 = vpow.pop %v984
  %v986 = vadd.f32 %v985, 1.0
  %v987 = vrcp.pop %v986
  %v988 = vmul.f32 1.0, %v987
  %v989 = vtanh.pop %v975
  %v990 = vxor.u32 %v976, 2147483648
  %v991 = vmul.f32 %v990, 1.442695
  %v992 = vpow.pop %v991
  %v993 = vadd.f32 %v992, 1.0
  %v994 = vrcp.pop %v993
  %v995 = vmul.f32 1.0, %v994
  %v996 = vmul.f32 %v988, %v880
  %v997 = vmul.f32 %v982, %v989
  %v998 = vadd.f32 %v996, %v997
  %v999 = vtanh.pop %v998
  %v1000 = vmul.f32 %v995, %v999
  %v1001 = vpack.c.bf16 %v1000, %v1000
  %s1002 = scalar_lea.vmem [#allocation3], 8
  %1003 = vst [vmem:[%s1002] sm:$0xf] %v1001
  %s1004 = scalar_lea.vmem [#allocation2], 96
  %v1005 = vld [vmem:[%s1004] sm:$0xff]
  %v1006 = vld [vmem:[%s1004 + $0x8] sm:$0xff]
  %v1007 = vld [vmem:[%s1004 + $0x10] sm:$0xff]
  %v1008 = vld [vmem:[%s1004 + $0x18] sm:$0xff]
  %1009 = vmatprep.subr.bf16.mxu0 %v593
  %1010 = vmatpush1.bf16.msra.mxu0 %v592
  %1011 = vmatprep.subr.bf16.mxu0 %v597
  %1012 = vmatpush1.bf16.msra.mxu0 %v596
  %1013 = vmatprep.subr.bf16.mxu0 %v601
  %1014 = vmatpush1.bf16.msra.mxu0 %v600
  %1015 = vmatprep.subr.bf16.mxu0 %v605
  %1016 = vmatpush1.bf16.msra.mxu0 %v604
  %1017 = vmatprep.subr.bf16.mxu0 %v609
  %1018 = vmatpush1.bf16.msra.mxu0 %v608
  %1019 = vmatprep.subr.bf16.mxu0 %v613
  %1020 = vmatpush1.bf16.msra.mxu0 %v612
  %1021 = vmatprep.subr.bf16.mxu0 %v617
  %1022 = vmatpush1.bf16.msra.mxu0 %v616
  %1023 = vmatprep.subr.bf16.mxu0 %v621
  %1024 = vmatpush1.bf16.msra.mxu0 %v620
  %1025 = vmatprep.subr.bf16.mxu0 0
  %1026 = vmatpush1.bf16.msra.mxu0 0
  %1027 = vmatprep.subr.bf16.mxu0 0
  %1028 = vmatpush1.bf16.msra.mxu0 0
  %1029 = vmatprep.subr.bf16.mxu0 0
  %1030 = vmatpush1.bf16.msra.mxu0 0
  %1031 = vmatprep.subr.bf16.mxu0 0
  %1032 = vmatpush1.bf16.msra.mxu0 0
  %1033 = vmatprep.subr.bf16.mxu0 0
  %1034 = vmatpush1.bf16.msra.mxu0 0
  %1035 = vmatprep.subr.bf16.mxu0 0
  %1036 = vmatpush1.bf16.msra.mxu0 0
  %1037 = vmatprep.subr.bf16.mxu0 0
  %1038 = vmatpush1.bf16.msra.mxu0 0
  %1039 = vmatprep.subr.bf16.mxu0 0
  %1040 = vmatpush1.bf16.msra.mxu0 0
  %1041 = vmatprep.mubr.bf16.mxu0 0
  %1042 = vmatmul.mubr.bf16.gmra.mrb[0].mxu0 %v1001
  %v1043 = vpop.f32.mrb[0].mxu0
  %v1044 = vadd.f32 0.0, %v1043
  %v1045 = vpop.f32.mrb[0].mxu0
  %v1046 = vadd.f32 0.0, %v1045
  %v1047 = vpop.f32.mrb[0].mxu0
  %v1048 = vpop.f32.mrb[0].mxu0
  %1049 = vdwg.mxu0
  %1050 = vmatprep.subr.bf16.mxu0 %v595
  %1051 = vmatpush1.bf16.msra.mxu0 %v594
  %1052 = vmatprep.subr.bf16.mxu0 %v599
  %1053 = vmatpush1.bf16.msra.mxu0 %v598
  %1054 = vmatprep.subr.bf16.mxu0 %v603
  %1055 = vmatpush1.bf16.msra.mxu0 %v602
  %1056 = vmatprep.subr.bf16.mxu0 %v607
  %1057 = vmatpush1.bf16.msra.mxu0 %v606
  %1058 = vmatprep.subr.bf16.mxu0 %v611
  %1059 = vmatpush1.bf16.msra.mxu0 %v610
  %1060 = vmatprep.subr.bf16.mxu0 %v615
  %1061 = vmatpush1.bf16.msra.mxu0 %v614
  %1062 = vmatprep.subr.bf16.mxu0 %v619
  %1063 = vmatpush1.bf16.msra.mxu0 %v618
  %1064 = vmatprep.subr.bf16.mxu0 %v623
  %1065 = vmatpush1.bf16.msra.mxu0 %v622
  %1066 = vmatprep.subr.bf16.mxu0 0
  %1067 = vmatpush1.bf16.msra.mxu0 0
  %1068 = vmatprep.subr.bf16.mxu0 0
  %1069 = vmatpush1.bf16.msra.mxu0 0
  %1070 = vmatprep.subr.bf16.mxu0 0
  %1071 = vmatpush1.bf16.msra.mxu0 0
  %1072 = vmatprep.subr.bf16.mxu0 0
  %1073 = vmatpush1.bf16.msra.mxu0 0
  %1074 = vmatprep.subr.bf16.mxu0 0
  %1075 = vmatpush1.bf16.msra.mxu0 0
  %1076 = vmatprep.subr.bf16.mxu0 0
  %1077 = vmatpush1.bf16.msra.mxu0 0
  %1078 = vmatprep.subr.bf16.mxu0 0
  %1079 = vmatpush1.bf16.msra.mxu0 0
  %1080 = vmatprep.subr.bf16.mxu0 0
  %1081 = vmatpush1.bf16.msra.mxu0 0
  %1082 = vmatprep.mubr.bf16.mxu0 0
  %1083 = vmatmul.mubr.bf16.gmra.mrb[0].mxu0 %v1001
  %v1084 = vpop.f32.mrb[0].mxu0
  %v1085 = vadd.f32 0.0, %v1084
  %v1086 = vpop.f32.mrb[0].mxu0
  %v1087 = vadd.f32 0.0, %v1086
  %v1088 = vpop.f32.mrb[0].mxu0
  %v1089 = vpop.f32.mrb[0].mxu0
  %1090 = vdwg.mxu0
  %v1091 = vadd.f32 %v1005, %v1044
  %v1092 = vadd.f32 %v1006, %v1046
  %v1093 = vadd.f32 %v1007, %v1085
  %v1094 = vadd.f32 %v1008, %v1087
  %v1095 = vxor.u32 %v1091, 2147483648
  %v1096 = vmul.f32 %v1095, 1.442695
  %v1097 = vpow.pop %v1096
  %v1098 = vadd.f32 %v1097, 1.0
  %v1099 = vrcp.pop %v1098
  %v1100 = vmul.f32 1.0, %v1099
  %v1101 = vxor.u32 %v1092, 2147483648
  %v1102 = vmul.f32 %v1101, 1.442695
  %v1103 = vpow.pop %v1102
  %v1104 = vadd.f32 %v1103, 1.0
  %v1105 = vrcp.pop %v1104
  %v1106 = vmul.f32 1.0, %v1105
  %v1107 = vtanh.pop %v1093
  %v1108 = vxor.u32 %v1094, 2147483648
  %v1109 = vmul.f32 %v1108, 1.442695
  %v1110 = vpow.pop %v1109
  %v1111 = vadd.f32 %v1110, 1.0
  %v1112 = vrcp.pop %v1111
  %v1113 = vmul.f32 1.0, %v1112
  %v1114 = vmul.f32 %v1106, %v998
  %v1115 = vmul.f32 %v1100, %v1107
  %v1116 = vadd.f32 %v1114, %v1115
  %v1117 = vtanh.pop %v1116
  %v1118 = vmul.f32 %v1113, %v1117
  %v1119 = vpack.c.bf16 %v1118, %v1118
  %s1120 = scalar_lea.vmem [#allocation3], 12
  %1121 = vst [vmem:[%s1120] sm:$0xf] %v1119
  %s1122 = scalar_lea.vmem [#allocation2], 128
  %v1123 = vld [vmem:[%s1122] sm:$0xff]
  %v1124 = vld [vmem:[%s1122 + $0x8] sm:$0xff]
  %v1125 = vld [vmem:[%s1122 + $0x10] sm:$0xff]
  %v1126 = vld [vmem:[%s1122 + $0x18] sm:$0xff]
  %1127 = vmatprep.subr.bf16.mxu0 %v593
  %1128 = vmatpush1.bf16.msra.mxu0 %v592
  %1129 = vmatprep.subr.bf16.mxu0 %v597
  %1130 = vmatpush1.bf16.msra.mxu0 %v596
  %1131 = vmatprep.subr.bf16.mxu0 %v601
  %1132 = vmatpush1.bf16.msra.mxu0 %v600
  %1133 = vmatprep.subr.bf16.mxu0 %v605
  %1134 = vmatpush1.bf16.msra.mxu0 %v604
  %1135 = vmatprep.subr.bf16.mxu0 %v609
  %1136 = vmatpush1.bf16.msra.mxu0 %v608
  %1137 = vmatprep.subr.bf16.mxu0 %v613
  %1138 = vmatpush1.bf16.msra.mxu0 %v612
  %1139 = vmatprep.subr.bf16.mxu0 %v617
  %1140 = vmatpush1.bf16.msra.mxu0 %v616
  %1141 = vmatprep.subr.bf16.mxu0 %v621
  %1142 = vmatpush1.bf16.msra.mxu0 %v620
  %1143 = vmatprep.subr.bf16.mxu0 0
  %1144 = vmatpush1.bf16.msra.mxu0 0
  %1145 = vmatprep.subr.bf16.mxu0 0
  %1146 = vmatpush1.bf16.msra.mxu0 0
  %1147 = vmatprep.subr.bf16.mxu0 0
  %1148 = vmatpush1.bf16.msra.mxu0 0
  %1149 = vmatprep.subr.bf16.mxu0 0
  %1150 = vmatpush1.bf16.msra.mxu0 0
  %1151 = vmatprep.subr.bf16.mxu0 0
  %1152 = vmatpush1.bf16.msra.mxu0 0
  %1153 = vmatprep.subr.bf16.mxu0 0
  %1154 = vmatpush1.bf16.msra.mxu0 0
  %1155 = vmatprep.subr.bf16.mxu0 0
  %1156 = vmatpush1.bf16.msra.mxu0 0
  %1157 = vmatprep.subr.bf16.mxu0 0
  %1158 = vmatpush1.bf16.msra.mxu0 0
  %1159 = vmatprep.mubr.bf16.mxu0 0
  %1160 = vmatmul.mubr.bf16.gmra.mrb[0].mxu0 %v1119
  %v1161 = vpop.f32.mrb[0].mxu0
  %v1162 = vadd.f32 0.0, %v1161
  %v1163 = vpop.f32.mrb[0].mxu0
  %v1164 = vadd.f32 0.0, %v1163
  %v1165 = vpop.f32.mrb[0].mxu0
  %v1166 = vpop.f32.mrb[0].mxu0
  %1167 = vdwg.mxu0
  %1168 = vmatprep.subr.bf16.mxu0 %v595
  %1169 = vmatpush1.bf16.msra.mxu0 %v594
  %1170 = vmatprep.subr.bf16.mxu0 %v599
  %1171 = vmatpush1.bf16.msra.mxu0 %v598
  %1172 = vmatprep.subr.bf16.mxu0 %v603
  %1173 = vmatpush1.bf16.msra.mxu0 %v602
  %1174 = vmatprep.subr.bf16.mxu0 %v607
  %1175 = vmatpush1.bf16.msra.mxu0 %v606
  %1176 = vmatprep.subr.bf16.mxu0 %v611
  %1177 = vmatpush1.bf16.msra.mxu0 %v610
  %1178 = vmatprep.subr.bf16.mxu0 %v615
  %1179 = vmatpush1.bf16.msra.mxu0 %v614
  %1180 = vmatprep.subr.bf16.mxu0 %v619
  %1181 = vmatpush1.bf16.msra.mxu0 %v618
  %1182 = vmatprep.subr.bf16.mxu0 %v623
  %1183 = vmatpush1.bf16.msra.mxu0 %v622
  %1184 = vmatprep.subr.bf16.mxu0 0
  %1185 = vmatpush1.bf16.msra.mxu0 0
  %1186 = vmatprep.subr.bf16.mxu0 0
  %1187 = vmatpush1.bf16.msra.mxu0 0
  %1188 = vmatprep.subr.bf16.mxu0 0
  %1189 = vmatpush1.bf16.msra.mxu0 0
  %1190 = vmatprep.subr.bf16.mxu0 0
  %1191 = vmatpush1.bf16.msra.mxu0 0
  %1192 = vmatprep.subr.bf16.mxu0 0
  %1193 = vmatpush1.bf16.msra.mxu0 0
  %1194 = vmatprep.subr.bf16.mxu0 0
  %1195 = vmatpush1.bf16.msra.mxu0 0
  %1196 = vmatprep.subr.bf16.mxu0 0
  %1197 = vmatpush1.bf16.msra.mxu0 0
  %1198 = vmatprep.subr.bf16.mxu0 0
  %1199 = vmatpush1.bf16.msra.mxu0 0
  %1200 = vmatprep.mubr.bf16.mxu0 0
  %1201 = vmatmul.mubr.bf16.gmra.mrb[0].mxu0 %v1119
  %v1202 = vpop.f32.mrb[0].mxu0
  %v1203 = vadd.f32 0.0, %v1202
  %v1204 = vpop.f32.mrb[0].mxu0
  %v1205 = vadd.f32 0.0, %v1204
  %v1206 = vpop.f32.mrb[0].mxu0
  %v1207 = vpop.f32.mrb[0].mxu0
  %1208 = vdwg.mxu0
  %v1209 = vadd.f32 %v1123, %v1162
  %v1210 = vadd.f32 %v1124, %v1164
  %v1211 = vadd.f32 %v1125, %v1203
  %v1212 = vadd.f32 %v1126, %v1205
  %v1213 = vxor.u32 %v1209, 2147483648
  %v1214 = vmul.f32 %v1213, 1.442695
  %v1215 = vpow.pop %v1214
  %v1216 = vadd.f32 %v1215, 1.0
  %v1217 = vrcp.pop %v1216
  %v1218 = vmul.f32 1.0, %v1217
  %v1219 = vxor.u32 %v1210, 2147483648
  %v1220 = vmul.f32 %v1219, 1.442695
  %v1221 = vpow.pop %v1220
  %v1222 = vadd.f32 %v1221, 1.0
  %v1223 = vrcp.pop %v1222
  %v1224 = vmul.f32 1.0, %v1223
  %v1225 = vtanh.pop %v1211
  %v1226 = vxor.u32 %v1212, 2147483648
  %v1227 = vmul.f32 %v1226, 1.442695
  %v1228 = vpow.pop %v1227
  %v1229 = vadd.f32 %v1228, 1.0
  %v1230 = vrcp.pop %v1229
  %v1231 = vmul.f32 1.0, %v1230
  %v1232 = vmul.f32 %v1224, %v1116
  %v1233 = vmul.f32 %v1218, %v1225
  %v1234 = vadd.f32 %v1232, %v1233
  %v1235 = vtanh.pop %v1234
  %v1236 = vmul.f32 %v1231, %v1235
  %v1237 = vpack.c.bf16 %v1236, %v1236
  %s1238 = scalar_lea.vmem [#allocation3], 16
  %1239 = vst [vmem:[%s1238] sm:$0xf] %v1237
  %s1240 = scalar_lea.vmem [#allocation2], 160
  %v1241 = vld [vmem:[%s1240] sm:$0xff]
  %v1242 = vld [vmem:[%s1240 + $0x8] sm:$0xff]
  %v1243 = vld [vmem:[%s1240 + $0x10] sm:$0xff]
  %v1244 = vld [vmem:[%s1240 + $0x18] sm:$0xff]
  %1245 = vmatprep.subr.bf16.mxu0 %v593
  %1246 = vmatpush1.bf16.msra.mxu0 %v592
  %1247 = vmatprep.subr.bf16.mxu0 %v597
  %1248 = vmatpush1.bf16.msra.mxu0 %v596
  %1249 = vmatprep.subr.bf16.mxu0 %v601
  %1250 = vmatpush1.bf16.msra.mxu0 %v600
  %1251 = vmatprep.subr.bf16.mxu0 %v605
  %1252 = vmatpush1.bf16.msra.mxu0 %v604
  %1253 = vmatprep.subr.bf16.mxu0 %v609
  %1254 = vmatpush1.bf16.msra.mxu0 %v608
  %1255 = vmatprep.subr.bf16.mxu0 %v613
  %1256 = vmatpush1.bf16.msra.mxu0 %v612
  %1257 = vmatprep.subr.bf16.mxu0 %v617
  %1258 = vmatpush1.bf16.msra.mxu0 %v616
  %1259 = vmatprep.subr.bf16.mxu0 %v621
  %1260 = vmatpush1.bf16.msra.mxu0 %v620
  %1261 = vmatprep.subr.bf16.mxu0 0
  %1262 = vmatpush1.bf16.msra.mxu0 0
  %1263 = vmatprep.subr.bf16.mxu0 0
  %1264 = vmatpush1.bf16.msra.mxu0 0
  %1265 = vmatprep.subr.bf16.mxu0 0
  %1266 = vmatpush1.bf16.msra.mxu0 0
  %1267 = vmatprep.subr.bf16.mxu0 0
  %1268 = vmatpush1.bf16.msra.mxu0 0
  %1269 = vmatprep.subr.bf16.mxu0 0
  %1270 = vmatpush1.bf16.msra.mxu0 0
  %1271 = vmatprep.subr.bf16.mxu0 0
  %1272 = vmatpush1.bf16.msra.mxu0 0
  %1273 = vmatprep.subr.bf16.mxu0 0
  %1274 = vmatpush1.bf16.msra.mxu0 0
  %1275 = vmatprep.subr.bf16.mxu0 0
  %1276 = vmatpush1.bf16.msra.mxu0 0
  %1277 = vmatprep.mubr.bf16.mxu0 0
  %1278 = vmatmul.mubr.bf16.gmra.mrb[0].mxu0 %v1237
  %v1279 = vpop.f32.mrb[0].mxu0
  %v1280 = vadd.f32 0.0, %v1279
  %v1281 = vpop.f32.mrb[0].mxu0
  %v1282 = vadd.f32 0.0, %v1281
  %v1283 = vpop.f32.mrb[0].mxu0
  %v1284 = vpop.f32.mrb[0].mxu0
  %1285 = vdwg.mxu0
  %1286 = vmatprep.subr.bf16.mxu0 %v595
  %1287 = vmatpush1.bf16.msra.mxu0 %v594
  %1288 = vmatprep.subr.bf16.mxu0 %v599
  %1289 = vmatpush1.bf16.msra.mxu0 %v598
  %1290 = vmatprep.subr.bf16.mxu0 %v603
  %1291 = vmatpush1.bf16.msra.mxu0 %v602
  %1292 = vmatprep.subr.bf16.mxu0 %v607
  %1293 = vmatpush1.bf16.msra.mxu0 %v606
  %1294 = vmatprep.subr.bf16.mxu0 %v611
  %1295 = vmatpush1.bf16.msra.mxu0 %v610
  %1296 = vmatprep.subr.bf16.mxu0 %v615
  %1297 = vmatpush1.bf16.msra.mxu0 %v614
  %1298 = vmatprep.subr.bf16.mxu0 %v619
  %1299 = vmatpush1.bf16.msra.mxu0 %v618
  %1300 = vmatprep.subr.bf16.mxu0 %v623
  %1301 = vmatpush1.bf16.msra.mxu0 %v622
  %1302 = vmatprep.subr.bf16.mxu0 0
  %1303 = vmatpush1.bf16.msra.mxu0 0
  %1304 = vmatprep.subr.bf16.mxu0 0
  %1305 = vmatpush1.bf16.msra.mxu0 0
  %1306 = vmatprep.subr.bf16.mxu0 0
  %1307 = vmatpush1.bf16.msra.mxu0 0
  %1308 = vmatprep.subr.bf16.mxu0 0
  %1309 = vmatpush1.bf16.msra.mxu0 0
  %1310 = vmatprep.subr.bf16.mxu0 0
  %1311 = vmatpush1.bf16.msra.mxu0 0
  %1312 = vmatprep.subr.bf16.mxu0 0
  %1313 = vmatpush1.bf16.msra.mxu0 0
  %1314 = vmatprep.subr.bf16.mxu0 0
  %1315 = vmatpush1.bf16.msra.mxu0 0
  %1316 = vmatprep.subr.bf16.mxu0 0
  %1317 = vmatpush1.bf16.msra.mxu0 0
  %1318 = vmatprep.mubr.bf16.mxu0 0
  %1319 = vmatmul.mubr.bf16.gmra.mrb[0].mxu0 %v1237
  %v1320 = vpop.f32.mrb[0].mxu0
  %v1321 = vadd.f32 0.0, %v1320
  %v1322 = vpop.f32.mrb[0].mxu0
  %v1323 = vadd.f32 0.0, %v1322
  %v1324 = vpop.f32.mrb[0].mxu0
  %v1325 = vpop.f32.mrb[0].mxu0
  %1326 = vdwg.mxu0
  %v1327 = vadd.f32 %v1241, %v1280
  %v1328 = vadd.f32 %v1242, %v1282
  %v1329 = vadd.f32 %v1243, %v1321
  %v1330 = vadd.f32 %v1244, %v1323
  %v1331 = vxor.u32 %v1327, 2147483648
  %v1332 = vmul.f32 %v1331, 1.442695
  %v1333 = vpow.pop %v1332
  %v1334 = vadd.f32 %v1333, 1.0
  %v1335 = vrcp.pop %v1334
  %v1336 = vmul.f32 1.0, %v1335
  %v1337 = vxor.u32 %v1328, 2147483648
  %v1338 = vmul.f32 %v1337, 1.442695
  %v1339 = vpow.pop %v1338
  %v1340 = vadd.f32 %v1339, 1.0
  %v1341 = vrcp.pop %v1340
  %v1342 = vmul.f32 1.0, %v1341
  %v1343 = vtanh.pop %v1329
  %v1344 = vxor.u32 %v1330, 2147483648
  %v1345 = vmul.f32 %v1344, 1.442695
  %v1346 = vpow.pop %v1345
  %v1347 = vadd.f32 %v1346, 1.0
  %v1348 = vrcp.pop %v1347
  %v1349 = vmul.f32 1.0, %v1348
  %v1350 = vmul.f32 %v1342, %v1234
  %v1351 = vmul.f32 %v1336, %v1343
  %v1352 = vadd.f32 %v1350, %v1351
  %v1353 = vtanh.pop %v1352
  %v1354 = vmul.f32 %v1349, %v1353
  %v1355 = vpack.c.bf16 %v1354, %v1354
  %s1356 = scalar_lea.vmem [#allocation3], 20
  %1357 = vst [vmem:[%s1356] sm:$0xf] %v1355
  %s1358 = scalar_lea.vmem [#allocation2], 192
  %v1359 = vld [vmem:[%s1358] sm:$0xff]
  %v1360 = vld [vmem:[%s1358 + $0x8] sm:$0xff]
  %v1361 = vld [vmem:[%s1358 + $0x10] sm:$0xff]
  %v1362 = vld [vmem:[%s1358 + $0x18] sm:$0xff]
  %1363 = vmatprep.subr.bf16.mxu0 %v593
  %1364 = vmatpush1.bf16.msra.mxu0 %v592
  %1365 = vmatprep.subr.bf16.mxu0 %v597
  %1366 = vmatpush1.bf16.msra.mxu0 %v596
  %1367 = vmatprep.subr.bf16.mxu0 %v601
  %1368 = vmatpush1.bf16.msra.mxu0 %v600
  %1369 = vmatprep.subr.bf16.mxu0 %v605
  %1370 = vmatpush1.bf16.msra.mxu0 %v604
  %1371 = vmatprep.subr.bf16.mxu0 %v609
  %1372 = vmatpush1.bf16.msra.mxu0 %v608
  %1373 = vmatprep.subr.bf16.mxu0 %v613
  %1374 = vmatpush1.bf16.msra.mxu0 %v612
  %1375 = vmatprep.subr.bf16.mxu0 %v617
  %1376 = vmatpush1.bf16.msra.mxu0 %v616
  %1377 = vmatprep.subr.bf16.mxu0 %v621
  %1378 = vmatpush1.bf16.msra.mxu0 %v620
  %1379 = vmatprep.subr.bf16.mxu0 0
  %1380 = vmatpush1.bf16.msra.mxu0 0
  %1381 = vmatprep.subr.bf16.mxu0 0
  %1382 = vmatpush1.bf16.msra.mxu0 0
  %1383 = vmatprep.subr.bf16.mxu0 0
  %1384 = vmatpush1.bf16.msra.mxu0 0
  %1385 = vmatprep.subr.bf16.mxu0 0
  %1386 = vmatpush1.bf16.msra.mxu0 0
  %1387 = vmatprep.subr.bf16.mxu0 0
  %1388 = vmatpush1.bf16.msra.mxu0 0
  %1389 = vmatprep.subr.bf16.mxu0 0
  %1390 = vmatpush1.bf16.msra.mxu0 0
  %1391 = vmatprep.subr.bf16.mxu0 0
  %1392 = vmatpush1.bf16.msra.mxu0 0
  %1393 = vmatprep.subr.bf16.mxu0 0
  %1394 = vmatpush1.bf16.msra.mxu0 0
  %1395 = vmatprep.mubr.bf16.mxu0 0
  %1396 = vmatmul.mubr.bf16.gmra.mrb[0].mxu0 %v1355
  %v1397 = vpop.f32.mrb[0].mxu0
  %v1398 = vadd.f32 0.0, %v1397
  %v1399 = vpop.f32.mrb[0].mxu0
  %v1400 = vadd.f32 0.0, %v1399
  %v1401 = vpop.f32.mrb[0].mxu0
  %v1402 = vpop.f32.mrb[0].mxu0
  %1403 = vdwg.mxu0
  %1404 = vmatprep.subr.bf16.mxu0 %v595
  %1405 = vmatpush1.bf16.msra.mxu0 %v594
  %1406 = vmatprep.subr.bf16.mxu0 %v599
  %1407 = vmatpush1.bf16.msra.mxu0 %v598
  %1408 = vmatprep.subr.bf16.mxu0 %v603
  %1409 = vmatpush1.bf16.msra.mxu0 %v602
  %1410 = vmatprep.subr.bf16.mxu0 %v607
  %1411 = vmatpush1.bf16.msra.mxu0 %v606
  %1412 = vmatprep.subr.bf16.mxu0 %v611
  %1413 = vmatpush1.bf16.msra.mxu0 %v610
  %1414 = vmatprep.subr.bf16.mxu0 %v615
  %1415 = vmatpush1.bf16.msra.mxu0 %v614
  %1416 = vmatprep.subr.bf16.mxu0 %v619
  %1417 = vmatpush1.bf16.msra.mxu0 %v618
  %1418 = vmatprep.subr.bf16.mxu0 %v623
  %1419 = vmatpush1.bf16.msra.mxu0 %v622
  %1420 = vmatprep.subr.bf16.mxu0 0
  %1421 = vmatpush1.bf16.msra.mxu0 0
  %1422 = vmatprep.subr.bf16.mxu0 0
  %1423 = vmatpush1.bf16.msra.mxu0 0
  %1424 = vmatprep.subr.bf16.mxu0 0
  %1425 = vmatpush1.bf16.msra.mxu0 0
  %1426 = vmatprep.subr.bf16.mxu0 0
  %1427 = vmatpush1.bf16.msra.mxu0 0
  %1428 = vmatprep.subr.bf16.mxu0 0
  %1429 = vmatpush1.bf16.msra.mxu0 0
  %1430 = vmatprep.subr.bf16.mxu0 0
  %1431 = vmatpush1.bf16.msra.mxu0 0
  %1432 = vmatprep.subr.bf16.mxu0 0
  %1433 = vmatpush1.bf16.msra.mxu0 0
  %1434 = vmatprep.subr.bf16.mxu0 0
  %1435 = vmatpush1.bf16.msra.mxu0 0
  %1436 = vmatprep.mubr.bf16.mxu0 0
  %1437 = vmatmul.mubr.bf16.gmra.mrb[0].mxu0 %v1355
  %v1438 = vpop.f32.mrb[0].mxu0
  %v1439 = vadd.f32 0.0, %v1438
  %v1440 = vpop.f32.mrb[0].mxu0
  %v1441 = vadd.f32 0.0, %v1440
  %v1442 = vpop.f32.mrb[0].mxu0
  %v1443 = vpop.f32.mrb[0].mxu0
  %1444 = vdwg.mxu0
  %v1445 = vadd.f32 %v1359, %v1398
  %v1446 = vadd.f32 %v1360, %v1400
  %v1447 = vadd.f32 %v1361, %v1439
  %v1448 = vadd.f32 %v1362, %v1441
  %v1449 = vxor.u32 %v1445, 2147483648
  %v1450 = vmul.f32 %v1449, 1.442695
  %v1451 = vpow.pop %v1450
  %v1452 = vadd.f32 %v1451, 1.0
  %v1453 = vrcp.pop %v1452
  %v1454 = vmul.f32 1.0, %v1453
  %v1455 = vxor.u32 %v1446, 2147483648
  %v1456 = vmul.f32 %v1455, 1.442695
  %v1457 = vpow.pop %v1456
  %v1458 = vadd.f32 %v1457, 1.0
  %v1459 = vrcp.pop %v1458
  %v1460 = vmul.f32 1.0, %v1459
  %v1461 = vtanh.pop %v1447
  %v1462 = vxor.u32 %v1448, 2147483648
  %v1463 = vmul.f32 %v1462, 1.442695
  %v1464 = vpow.pop %v1463
  %v1465 = vadd.f32 %v1464, 1.0
  %v1466 = vrcp.pop %v1465
  %v1467 = vmul.f32 1.0, %v1466
  %v1468 = vmul.f32 %v1460, %v1352
  %v1469 = vmul.f32 %v1454, %v1461
  %v1470 = vadd.f32 %v1468, %v1469
  %v1471 = vtanh.pop %v1470
  %v1472 = vmul.f32 %v1467, %v1471
  %v1473 = vpack.c.bf16 %v1472, %v1472
  %s1474 = scalar_lea.vmem [#allocation3], 24
  %1475 = vst [vmem:[%s1474] sm:$0xf] %v1473
  %s1476 = scalar_lea.vmem [#allocation2], 224
  %v1477 = vld [vmem:[%s1476] sm:$0xff]
  %v1478 = vld [vmem:[%s1476 + $0x8] sm:$0xff]
  %v1479 = vld [vmem:[%s1476 + $0x10] sm:$0xff]
  %v1480 = vld [vmem:[%s1476 + $0x18] sm:$0xff]
  %1481 = vmatprep.subr.bf16.mxu0 %v593
  %1482 = vmatpush1.bf16.msra.mxu0 %v592
  %1483 = vmatprep.subr.bf16.mxu0 %v597
  %1484 = vmatpush1.bf16.msra.mxu0 %v596
  %1485 = vmatprep.subr.bf16.mxu0 %v601
  %1486 = vmatpush1.bf16.msra.mxu0 %v600
  %1487 = vmatprep.subr.bf16.mxu0 %v605
  %1488 = vmatpush1.bf16.msra.mxu0 %v604
  %1489 = vmatprep.subr.bf16.mxu0 %v609
  %1490 = vmatpush1.bf16.msra.mxu0 %v608
  %1491 = vmatprep.subr.bf16.mxu0 %v613
  %1492 = vmatpush1.bf16.msra.mxu0 %v612
  %1493 = vmatprep.subr.bf16.mxu0 %v617
  %1494 = vmatpush1.bf16.msra.mxu0 %v616
  %1495 = vmatprep.subr.bf16.mxu0 %v621
  %1496 = vmatpush1.bf16.msra.mxu0 %v620
  %1497 = vmatprep.subr.bf16.mxu0 0
  %1498 = vmatpush1.bf16.msra.mxu0 0
  %1499 = vmatprep.subr.bf16.mxu0 0
  %1500 = vmatpush1.bf16.msra.mxu0 0
  %1501 = vmatprep.subr.bf16.mxu0 0
  %1502 = vmatpush1.bf16.msra.mxu0 0
  %1503 = vmatprep.subr.bf16.mxu0 0
  %1504 = vmatpush1.bf16.msra.mxu0 0
  %1505 = vmatprep.subr.bf16.mxu0 0
  %1506 = vmatpush1.bf16.msra.mxu0 0
  %1507 = vmatprep.subr.bf16.mxu0 0
  %1508 = vmatpush1.bf16.msra.mxu0 0
  %1509 = vmatprep.subr.bf16.mxu0 0
  %1510 = vmatpush1.bf16.msra.mxu0 0
  %1511 = vmatprep.subr.bf16.mxu0 0
  %1512 = vmatpush1.bf16.msra.mxu0 0
  %1513 = vmatprep.mubr.bf16.mxu0 0
  %1514 = vmatmul.mubr.bf16.gmra.mrb[0].mxu0 %v1473
  %v1515 = vpop.f32.mrb[0].mxu0
  %v1516 = vadd.f32 0.0, %v1515
  %v1517 = vpop.f32.mrb[0].mxu0
  %v1518 = vadd.f32 0.0, %v1517
  %v1519 = vpop.f32.mrb[0].mxu0
  %v1520 = vpop.f32.mrb[0].mxu0
  %1521 = vdwg.mxu0
  %1522 = vmatprep.subr.bf16.mxu0 %v595
  %1523 = vmatpush1.bf16.msra.mxu0 %v594
  %1524 = vmatprep.subr.bf16.mxu0 %v599
  %1525 = vmatpush1.bf16.msra.mxu0 %v598
  %1526 = vmatprep.subr.bf16.mxu0 %v603
  %1527 = vmatpush1.bf16.msra.mxu0 %v602
  %1528 = vmatprep.subr.bf16.mxu0 %v607
  %1529 = vmatpush1.bf16.msra.mxu0 %v606
  %1530 = vmatprep.subr.bf16.mxu0 %v611
  %1531 = vmatpush1.bf16.msra.mxu0 %v610
  %1532 = vmatprep.subr.bf16.mxu0 %v615
  %1533 = vmatpush1.bf16.msra.mxu0 %v614
  %1534 = vmatprep.subr.bf16.mxu0 %v619
  %1535 = vmatpush1.bf16.msra.mxu0 %v618
  %1536 = vmatprep.subr.bf16.mxu0 %v623
  %1537 = vmatpush1.bf16.msra.mxu0 %v622
  %1538 = vmatprep.subr.bf16.mxu0 0
  %1539 = vmatpush1.bf16.msra.mxu0 0
  %1540 = vmatprep.subr.bf16.mxu0 0
  %1541 = vmatpush1.bf16.msra.mxu0 0
  %1542 = vmatprep.subr.bf16.mxu0 0
  %1543 = vmatpush1.bf16.msra.mxu0 0
  %1544 = vmatprep.subr.bf16.mxu0 0
  %1545 = vmatpush1.bf16.msra.mxu0 0
  %1546 = vmatprep.subr.bf16.mxu0 0
  %1547 = vmatpush1.bf16.msra.mxu0 0
  %1548 = vmatprep.subr.bf16.mxu0 0
  %1549 = vmatpush1.bf16.msra.mxu0 0
  %1550 = vmatprep.subr.bf16.mxu0 0
  %1551 = vmatpush1.bf16.msra.mxu0 0
  %1552 = vmatprep.subr.bf16.mxu0 0
  %1553 = vmatpush1.bf16.msra.mxu0 0
  %1554 = vmatprep.mubr.bf16.mxu0 0
  %1555 = vmatmul.mubr.bf16.gmra.mrb[0].mxu0 %v1473
  %v1556 = vpop.f32.mrb[0].mxu0
  %v1557 = vadd.f32 0.0, %v1556
  %v1558 = vpop.f32.mrb[0].mxu0
  %v1559 = vadd.f32 0.0, %v1558
  %v1560 = vpop.f32.mrb[0].mxu0
  %v1561 = vpop.f32.mrb[0].mxu0
  %1562 = vdwg.mxu0
  %v1563 = vadd.f32 %v1477, %v1516
  %v1564 = vadd.f32 %v1478, %v1518
  %v1565 = vadd.f32 %v1479, %v1557
  %v1566 = vadd.f32 %v1480, %v1559
  %v1567 = vxor.u32 %v1563, 2147483648
  %v1568 = vmul.f32 %v1567, 1.442695
  %v1569 = vpow.pop %v1568
  %v1570 = vadd.f32 %v1569, 1.0
  %v1571 = vrcp.pop %v1570
  %v1572 = vmul.f32 1.0, %v1571
  %v1573 = vxor.u32 %v1564, 2147483648
  %v1574 = vmul.f32 %v1573, 1.442695
  %v1575 = vpow.pop %v1574
  %v1576 = vadd.f32 %v1575, 1.0
  %v1577 = vrcp.pop %v1576
  %v1578 = vmul.f32 1.0, %v1577
  %v1579 = vtanh.pop %v1565
  %v1580 = vxor.u32 %v1566, 2147483648
  %v1581 = vmul.f32 %v1580, 1.442695
  %v1582 = vpow.pop %v1581
  %v1583 = vadd.f32 %v1582, 1.0
  %v1584 = vrcp.pop %v1583
  %v1585 = vmul.f32 1.0, %v1584
  %v1586 = vmul.f32 %v1578, %v1470
  %v1587 = vmul.f32 %v1572, %v1579
  %v1588 = vadd.f32 %v1586, %v1587
  %v1589 = vtanh.pop %v1588
  %v1590 = vmul.f32 %v1585, %v1589
  %v1591 = vpack.c.bf16 %v1590, %v1590
  %s1592 = scalar_lea.vmem [#allocation3], 28
  %1593 = vst [vmem:[%s1592] sm:$0xf] %v1591
  %1594 = vst [vmem:[%s7] sm:$0xff] %v1590
  %1595 = vst [vmem:[%s8] sm:$0xff] %v1588
  %v1596 = vld [vmem:[#allocation3] sm:$0xf]
  %v1597 = vld [vmem:[#allocation3 + $0x4] sm:$0xf]
  %v1598 = vld [vmem:[#allocation3 + $0x8] sm:$0xf]
  %v1599 = vld [vmem:[#allocation3 + $0xc] sm:$0xf]
  %v1600 = vld [vmem:[#allocation3 + $0x10] sm:$0xf]
  %v1601 = vld [vmem:[#allocation3 + $0x14] sm:$0xf]
  %v1602 = vld [vmem:[#allocation3 + $0x18] sm:$0xf]
  %v1603 = vld [vmem:[#allocation3 + $0x1c] sm:$0xf]
  %v1604 = vld [vmem:[%s5] sm:$0x1]
  %v1606 = vlaneseq
  %v1607 = vshrl.u32 %v1606, 7
  %v1608 = vsub.s32 0, %v1607
  %v1609 = vrot.slane %v1604, %v1608
  %v1611 = vld [vmem:[%s4] sm:$0xf]
  %v1612 = vld [vmem:[%s4 + $0x4] sm:$0xf]
  %v1613 = vld [vmem:[%s4 + $0x8] sm:$0xf]
  %v1614 = vld [vmem:[%s4 + $0xc] sm:$0xf]
  %v1615 = vld [vmem:[%s4 + $0x10] sm:$0xf]
  %v1616 = vld [vmem:[%s4 + $0x14] sm:$0xf]
  %v1617 = vld [vmem:[%s4 + $0x18] sm:$0xf]
  %v1618 = vld [vmem:[%s4 + $0x1c] sm:$0xf]
  %v1619 = vld [vmem:[%s4 + $0x20] sm:$0xf]
  %v1620 = vld [vmem:[%s4 + $0x24] sm:$0xf]
  %v1621 = vld [vmem:[%s4 + $0x28] sm:$0xf]
  %v1622 = vld [vmem:[%s4 + $0x2c] sm:$0xf]
  %v1623 = vld [vmem:[%s4 + $0x30] sm:$0xf]
  %v1624 = vld [vmem:[%s4 + $0x34] sm:$0xf]
  %v1625 = vld [vmem:[%s4 + $0x38] sm:$0xf]
  %v1626 = vld [vmem:[%s4 + $0x3c] sm:$0xf]
  %v1635 = vunpack.c.l.b16 %v1596
  %v1636 = vunpack.c.l.b16 %v1597
  %v1637 = vunpack.c.l.b16 %v1598
  %v1638 = vunpack.c.l.b16 %v1599
  %v1639 = vunpack.c.l.b16 %v1600
  %v1640 = vunpack.c.l.b16 %v1601
  %v1641 = vunpack.c.l.b16 %v1602
  %v1642 = vunpack.c.l.b16 %v1603
  %v1643 = vpack.c.b16 %v1636, %v1635
  %v1644 = vpack.c.b16 %v1638, %v1637
  %v1645 = vpack.c.b16 %v1640, %v1639
  %v1646 = vpack.c.b16 %v1642, %v1641
  %v1667 = vunpack.c.l.b16 %v1611
  %v1668 = vunpack.c.l.b16 %v1612
  %v1669 = vunpack.c.l.b16 %v1613
  %v1670 = vunpack.c.l.b16 %v1614
  %v1671 = vunpack.c.l.b16 %v1615
  %v1672 = vunpack.c.l.b16 %v1616
  %v1673 = vunpack.c.l.b16 %v1617
  %v1674 = vunpack.c.l.b16 %v1618
  %v1675 = vunpack.c.l.b16 %v1619
  %v1676 = vunpack.c.l.b16 %v1620
  %v1677 = vunpack.c.l.b16 %v1621
  %v1678 = vunpack.c.l.b16 %v1622
  %v1679 = vunpack.c.l.b16 %v1623
  %v1680 = vunpack.c.l.b16 %v1624
  %v1681 = vunpack.c.l.b16 %v1625
  %v1682 = vunpack.c.l.b16 %v1626
  %v1683 = vpack.c.b16 %v1668, %v1667
  %v1684 = vpack.c.b16 %v1670, %v1669
  %v1685 = vpack.c.b16 %v1672, %v1671
  %v1686 = vpack.c.b16 %v1674, %v1673
  %v1687 = vpack.c.b16 %v1676, %v1675
  %v1688 = vpack.c.b16 %v1678, %v1677
  %v1689 = vpack.c.b16 %v1680, %v1679
  %v1690 = vpack.c.b16 %v1682, %v1681
  %1699 = vmatprep.subr.bf16.mxu0 0
  %1700 = vmatpush1.bf16.msra.mxu0 %v1683
  %1701 = vmatprep.subr.bf16.mxu0 0
  %1702 = vmatpush1.bf16.msra.mxu0 %v1684
  %1703 = vmatprep.subr.bf16.mxu0 0
  %1704 = vmatpush1.bf16.msra.mxu0 %v1685
  %1705 = vmatprep.subr.bf16.mxu0 0
  %1706 = vmatpush1.bf16.msra.mxu0 %v1686
  %1707 = vmatprep.subr.bf16.mxu0 0
  %1708 = vmatpush1.bf16.msra.mxu0 %v1687
  %1709 = vmatprep.subr.bf16.mxu0 0
  %1710 = vmatpush1.bf16.msra.mxu0 %v1688
  %1711 = vmatprep.subr.bf16.mxu0 0
  %1712 = vmatpush1.bf16.msra.mxu0 %v1689
  %1713 = vmatprep.subr.bf16.mxu0 0
  %1714 = vmatpush1.bf16.msra.mxu0 %v1690
  %1715 = vmatprep.subr.bf16.mxu0 0
  %1716 = vmatpush1.bf16.msra.mxu0 0
  %1717 = vmatprep.subr.bf16.mxu0 0
  %1718 = vmatpush1.bf16.msra.mxu0 0
  %1719 = vmatprep.subr.bf16.mxu0 0
  %1720 = vmatpush1.bf16.msra.mxu0 0
  %1721 = vmatprep.subr.bf16.mxu0 0
  %1722 = vmatpush1.bf16.msra.mxu0 0
  %1723 = vmatprep.subr.bf16.mxu0 0
  %1724 = vmatpush1.bf16.msra.mxu0 0
  %1725 = vmatprep.subr.bf16.mxu0 0
  %1726 = vmatpush1.bf16.msra.mxu0 0
  %1727 = vmatprep.subr.bf16.mxu0 0
  %1728 = vmatpush1.bf16.msra.mxu0 0
  %1729 = vmatprep.subr.bf16.mxu0 0
  %1730 = vmatpush1.bf16.msra.mxu0 0
  %1731 = vmatprep.mubr.bf16.mxu0 0
  %1732 = vmatmul.mubr.bf16.gmra.mrb[0].mxu0 %v1643
  %v1733 = vpop.f32.mrb[0].mxu0
  %v1734 = vadd.f32 %v1609, %v1733
  %v1735 = vpop.f32.mrb[0].mxu0
  %v1736 = vpop.f32.mrb[0].mxu0
  %v1737 = vadd.f32 %v1609, %v1736
  %v1738 = vpop.f32.mrb[0].mxu0
  %1739 = vmatprep.mubr.bf16.mxu0 0
  %1740 = vmatmul.mubr.bf16.gmra.mrb[0].mxu0 %v1644
  %v1741 = vpop.f32.mrb[0].mxu0
  %v1742 = vadd.f32 %v1609, %v1741
  %v1743 = vpop.f32.mrb[0].mxu0
  %v1744 = vpop.f32.mrb[0].mxu0
  %v1745 = vadd.f32 %v1609, %v1744
  %v1746 = vpop.f32.mrb[0].mxu0
  %1747 = vmatprep.mubr.bf16.mxu0 0
  %1748 = vmatmul.mubr.bf16.gmra.mrb[0].mxu0 %v1645
  %v1749 = vpop.f32.mrb[0].mxu0
  %v1750 = vadd.f32 %v1609, %v1749
  %v1751 = vpop.f32.mrb[0].mxu0
  %v1752 = vpop.f32.mrb[0].mxu0
  %v1753 = vadd.f32 %v1609, %v1752
  %v1754 = vpop.f32.mrb[0].mxu0
  %1755 = vmatprep.mubr.bf16.mxu0 0
  %1756 = vmatmul.mubr.bf16.gmra.mrb[0].mxu0 %v1646
  %v1757 = vpop.f32.mrb[0].mxu0
  %v1758 = vadd.f32 %v1609, %v1757
  %v1759 = vpop.f32.mrb[0].mxu0
  %v1760 = vpop.f32.mrb[0].mxu0
  %v1761 = vadd.f32 %v1609, %v1760
  %v1762 = vpop.f32.mrb[0].mxu0
  %1763 = vdwg.mxu0
  %v1764 = vpack.c.bf16 %v1734, %v1734
  %v1765 = vpack.c.bf16 %v1737, %v1737
  %v1766 = vpack.c.bf16 %v1742, %v1742
  %v1767 = vpack.c.bf16 %v1745, %v1745
  %v1768 = vpack.c.bf16 %v1750, %v1750
  %v1769 = vpack.c.bf16 %v1753, %v1753
  %v1770 = vpack.c.bf16 %v1758, %v1758
  %v1771 = vpack.c.bf16 %v1761, %v1761
  %1772 = vst [vmem:[%s6] sm:$0xf] %v1764
  %1773 = vst [vmem:[%s6 + $0x4] sm:$0xf] %v1765
  %1774 = vst [vmem:[%s6 + $0x8] sm:$0xf] %v1766
  %1775 = vst [vmem:[%s6 + $0xc] sm:$0xf] %v1767
  %1776 = vst [vmem:[%s6 + $0x10] sm:$0xf] %v1768
  %1777 = vst [vmem:[%s6 + $0x14] sm:$0xf] %v1769
  %1778 = vst [vmem:[%s6 + $0x18] sm:$0xf] %v1770
  %1779 = vst [vmem:[%s6 + $0x1c] sm:$0xf] %v1771
  // Predicated region
  $region30: #{lstm_forward.1} parent=0 // pred_check
    _
  $region31: #{lstm_forward.1} parent=0 // pred_check_branch
    %1781 = sbr.rel (0) target = $region33
  $region32: #{lstm_forward.1} parent=0 // pred_region
    _
  $region33: #{lstm_forward.1} parent=0 // pred_fallthru
    _
  // Predicated region
  $region34: #{lstm_forward.1} parent=0 // pred_check
    _
  $region35: #{lstm_forward.1} parent=0 // pred_check_branch
    %1783 = sbr.rel (0) target = $region37
  $region36: #{lstm_forward.1} parent=0 // pred_region
    _
  $region37: #{lstm_forward.1} parent=0 // pred_fallthru
    _
  // Predicated region
  $region38: #{lstm_forward.1} parent=0 // pred_check
    _
  $region39: #{lstm_forward.1} parent=0 // pred_check_branch
    %1785 = sbr.rel (0) target = $region41
  $region40: #{lstm_forward.1} parent=0 // pred_region
    _
  $region41: #{lstm_forward.1} parent=0 // pred_fallthru
    _
  // Predicated region
  $region42: #{lstm_forward.1} parent=0 // pred_check
    _
  $region43: #{lstm_forward.1} parent=0 // pred_check_branch
    %1787 = sbr.rel (0) target = $region45
  $region44: #{lstm_forward.1} parent=0 // pred_region
    _
  $region45: #{lstm_forward.1} parent=0 // pred_fallthru
    _
  // Predicated region
  $region46: #{lstm_forward.1} parent=0 // pred_check
    _
  $region47: #{lstm_forward.1} parent=0 // pred_check_branch
    %1789 = sbr.rel (0) target = $region49
  $region48: #{lstm_forward.1} parent=0 // pred_region
    _
  $region49: #{lstm_forward.1} parent=0 // pred_fallthru
    _
  // Predicated region
  $region50: #{lstm_forward.1} parent=0 // pred_check
    _
  $region51: #{lstm_forward.1} parent=0 // pred_check_branch
    %1791 = sbr.rel (0) target = $region53
  $region52: #{lstm_forward.1} parent=0 // pred_region
    _
  $region53: #{lstm_forward.1} parent=0 // pred_fallthru
    _

</llo_original>
